<compile_context>
chip_gen: v5e
topology: v5e:2x2
jax: 0.10.0
libtpu: 0.0.40
codegen_flags: <defaults>
</compile_context>

<pallas_src>
import numpy as np
import jax
import jax.numpy as jnp
from jax import lax
from jax.experimental import pallas as pl
from jax.experimental.pallas import tpu as pltpu


# ---------------------------------------------------------------------------
# Fused kernel: per packed graph block, NNConv1+ReLU -> NNConv2+ReLU -> rank-1
# pairwise logits, then a j-tiled sigmoid + bf16 store of the score matrix.
# ---------------------------------------------------------------------------
def gae_fused_kernel(a_ref, x_ref, r1_ref, b1_ref, r2_ref, b2_ref,
                     wa_ref, wb_ref, lb_ref, o_ref, u_sc, v_sc):
    j = pl.program_id(1)

    # GNN part: runs once per packed graph block (first j tile only). The bf16 A
    # block stays resident in VMEM across all j output tiles (index_map constant in j).
    @pl.when(j == 0)
    def _():
        a = a_ref[...]                                              # [G, N, N] bf16 (MXU native)
        x = x_ref[...]                                              # [G, N, D] f32

        # layer 1: constant-ones edge nn => per-edge message = sum(x_src) * 1_H,
        # mean aggregation == A @ rowsum(x)   (A rows are 1/deg).
        s1 = jnp.sum(x, axis=2, keepdims=True).astype(jnp.bfloat16)          # [G, N, 1]
        agg1 = lax.dot_general(a, s1, (((2,), (1,)), ((0,), (0,))),
                               preferred_element_type=jnp.float32)           # [G, N, 1]
        rt1 = lax.dot_general(x, r1_ref[...], (((2,), (0,)), ((), ())),
                              preferred_element_type=jnp.float32)            # [G, N, H]
        h1 = jnp.maximum(agg1 + rt1 + b1_ref[...], 0.0)

        # layer 2 (nn.Dropout(0.3) is identity in eval mode)
        s2 = jnp.sum(h1, axis=2, keepdims=True).astype(jnp.bfloat16)
        agg2 = lax.dot_general(a, s2, (((2,), (1,)), ((0,), (0,))),
                               preferred_element_type=jnp.float32)
        rt2 = lax.dot_general(h1, r2_ref[...], (((2,), (0,)), ((), ())),
                              preferred_element_type=jnp.float32)
        h2 = jnp.maximum(agg2 + rt2 + b2_ref[...], 0.0)                      # [G, N, H]

        # rank-1 decomposition of the pairwise logits:
        #   logit[g, i, j] = wa . h2[g, i]  +  wb . h2[g, j]  +  b
        u_sc[...] = lax.dot_general(h2, wa_ref[...], (((2,), (0,)), ((), ())),
                                    preferred_element_type=jnp.float32)      # [G, N, 1]
        g, hid = h2.shape[0], h2.shape[2]
        wb_b = jnp.broadcast_to(wb_ref[...].reshape(1, 1, hid), (g, 1, hid))
        v_sc[...] = lax.dot_general(wb_b, h2, (((2,), (2,)), ((0,), (0,))),
                                    preferred_element_type=jnp.float32)      # [G, 1, N]

    # Score tile [G, N, TJ]: outer-sum of per-node terms, sigmoid, bf16 store.
    tj = o_ref.shape[2]
    j0 = pl.multiple_of(j * tj, 128)
    logits = u_sc[...] + v_sc[:, :, pl.ds(j0, tj)] + lb_ref[...]
    # sigmoid(x) = 0.5 * tanh(0.5 x) + 0.5  -> one EUP op on the N^2 hot path.
    o_ref[...] = (0.5 * jnp.tanh(0.5 * logits) + 0.5).astype(o_ref.dtype)


# ---------------------------------------------------------------------------
# Tiling / VMEM-budget selection (per TPU generation).
# ---------------------------------------------------------------------------
def _round_up(n, m):
    return ((n + m - 1) // m) * m


def _vmem_capacity_bytes():
    try:
        cap = getattr(pltpu.get_tpu_info(), "vmem_capacity_bytes", None)
        if cap:
            return int(cap)
    except Exception:
        pass
    return 64 << 20          # v7x per-TensorCore VMEM; conservative default


def _choose_tiling(bsz, nmax):
    """Pick (graphs per grid step G, score-tile width TJ, vmem_limit_bytes)."""
    cap = _vmem_capacity_bytes()
    budget = int(0.80 * cap)
    tj = nmax if nmax <= 512 else 512
    # Honest per-graph resident-VMEM estimate: double-buffered bf16 A block,
    # double-buffered bf16 output tile, f32 logits/tanh temporaries, plus
    # lane-padded (to 128) x / h1 / h2 / u / v activations and scratch.
    per_graph = (4 * nmax * nmax          # bf16 A, double-buffered
                 + 4 * nmax * tj          # bf16 out tile, double-buffered
                 + 12 * nmax * tj         # f32 logits + tanh temporaries
                 + 5000 * nmax)           # lane-padded x/h1/h2/agg temps + u/v scratch
    g = int(max(1, min(bsz, budget // max(per_graph, 1))))
    vmem_limit = int(min(int(0.9 * cap), max(32 << 20, g * per_graph + (4 << 20))))
    return g, tj, vmem_limit


# ---------------------------------------------------------------------------
# pallas_call wrapper.
# ---------------------------------------------------------------------------
def gae_pallas_scores(a_pad, x_pad, params):
    bsz, nmax, d = x_pad.shape
    hid = params["root1"].shape[1]
    wa = params["lin_w"][0, :hid].reshape(hid, 1)
    wb = params["lin_w"][0, hid:].reshape(1, hid)
    lb = params["lin_b"].reshape(1, 1)
    b1 = params["bias1"].reshape(1, hid)
    b2 = params["bias2"].reshape(1, hid)

    g, tj, vmem_limit = _choose_tiling(bsz, nmax)
    bsz_pad = _round_up(bsz, g)
    if bsz_pad != bsz:                               # pad batch with empty graphs
        a_pad = jnp.pad(a_pad, ((0, bsz_pad - bsz), (0, 0), (0, 0)))
        x_pad = jnp.pad(x_pad, ((0, bsz_pad - bsz), (0, 0), (0, 0)))

    grid = (bsz_pad // g, nmax // tj)
    grid_spec = pltpu.PrefetchScalarGridSpec(
        num_scalar_prefetch=0,
        grid=grid,
        in_specs=[
            pl.BlockSpec((g, nmax, nmax), lambda b, j: (b, 0, 0)),   # A  (bf16)
            pl.BlockSpec((g, nmax, d), lambda b, j: (b, 0, 0)),      # x
            pl.BlockSpec((d, hid), lambda b, j: (0, 0)),             # root1
            pl.BlockSpec((1, hid), lambda b, j: (0, 0)),             # bias1
            pl.BlockSpec((hid, hid), lambda b, j: (0, 0)),           # root2
            pl.BlockSpec((1, hid), lambda b, j: (0, 0)),             # bias2
            pl.BlockSpec((hid, 1), lambda b, j: (0, 0)),             # wa
            pl.BlockSpec((1, hid), lambda b, j: (0, 0)),             # wb
            pl.BlockSpec((1, 1), lambda b, j: (0, 0)),               # linear bias
        ],
        out_specs=pl.BlockSpec((g, nmax, tj), lambda b, j: (b, 0, j)),
        scratch_shapes=[pltpu.VMEM((g, nmax, 1), jnp.float32),       # u[i] = wa . h2[i]
                        pltpu.VMEM((g, 1, nmax), jnp.float32)],      # v[j] = wb . h2[j]
    )
    return pl.pallas_call(
        gae_fused_kernel,
        out_shape=jax.ShapeDtypeStruct((bsz_pad, nmax, nmax), jnp.bfloat16),
        grid_spec=grid_spec,
        compiler_params=pltpu.CompilerParams(
            # Graph blocks are independent -> shard batch axis across v7x's 2 TCs.
            # j must stay sequential per block: u/v scratch is written at j == 0.
            dimension_semantics=("parallel", "arbitrary"),
            vmem_limit_bytes=vmem_limit),
    )(a_pad, x_pad, params["root1"], b1, params["root2"], b2, wa, wb, lb)


# ---------------------------------------------------------------------------
# Glue (plain JAX / numpy): per-graph padded features and block-diagonal,
# row-normalized incoming adjacency. Fully vectorized (no per-graph loop).
# ---------------------------------------------------------------------------
def build_padded_graph(x, edge_index, node_nums, nmax):
    node_nums = np.asarray(node_nums, dtype=np.int64)
    bsz = int(node_nums.shape[0])
    n_total = int(node_nums.sum())
    offsets = np.concatenate([[0], np.cumsum(node_nums)[:-1]])
    rep = np.repeat(np.arange(bsz), node_nums)
    g_of_node = jnp.asarray(rep, jnp.int32)
    l_of_node = jnp.asarray(np.arange(n_total) - offsets[rep], jnp.int32)

    d = x.shape[1]
    x_pad = jnp.zeros((bsz, nmax, d), jnp.float32).at[g_of_node, l_of_node].set(x)

    src, tgt = edge_index
    counts = jnp.zeros((bsz, nmax, nmax), jnp.float32).at[
        g_of_node[tgt], l_of_node[tgt], l_of_node[src]].add(1.0)
    deg = jnp.sum(counts, axis=2, keepdims=True)
    a_pad = jnp.where(deg > 0, counts / jnp.maximum(deg, 1.0), 0.0)
    return a_pad.astype(jnp.bfloat16), x_pad


def gae_forward(params, x, edge_index, node_nums):
    node_nums = np.asarray(node_nums)
    nmax = max(128, _round_up(int(node_nums.max()), 128))   # lane-dense score tiles
    if nmax > 512:
        nmax = _round_up(nmax, 512)                         # 512-wide j tiles divide evenly
    a_pad, x_pad = build_padded_graph(x, edge_index, node_nums, nmax)
    s = gae_pallas_scores(a_pad, x_pad, params)
    out = []
    for b, n in enumerate(node_nums):                 # tuple-of-ragged output format
        n = int(n)
        out.append(s[b, :n, :n].astype(jnp.float32).reshape(n * n))
    return tuple(out)


# ---------------------------------------------------------------------------
# Pure-JAX reference of the PyTorch forward (for correctness checking).
# ---------------------------------------------------------------------------
def build_mean_adjacency(edge_index, num_nodes):
    src, tgt = edge_index
    a = jnp.zeros((num_nodes, num_nodes), jnp.float32).at[tgt, src].add(1.0)
    deg = jnp.sum(a, axis=1, keepdims=True)
    return jnp.where(deg > 0, a / jnp.maximum(deg, 1.0), 0.0)


def gae_forward_ref(params, x, edge_index, node_nums):
    hp = jax.lax.Precision.HIGHEST
    a = build_mean_adjacency(edge_index, x.shape[0])
    s1 = jnp.sum(x, axis=1, keepdims=True)
    h1 = jnp.maximum(jnp.dot(a, s1, precision=hp)
                     + jnp.dot(x, params["root1"], precision=hp)
                     + params["bias1"][None, :], 0.0)
    s2 = jnp.sum(h1, axis=1, keepdims=True)
    h2 = jnp.maximum(jnp.dot(a, s2, precision=hp)
                     + jnp.dot(h1, params["root2"], precision=hp)
                     + params["bias2"][None, :], 0.0)
    out, off = [], 0
    for n in node_nums:
        n = int(n)
        hb = h2[off:off + n]
        left = jnp.repeat(hb, n, axis=0)          # row i*n+j -> h[i]
        right = jnp.tile(hb, (n, 1))              # row i*n+j -> h[j]
        cat = jnp.concatenate([left, right], axis=1)
        logit = jnp.dot(cat, params["lin_w"].T, precision=hp) + params["lin_b"]
        out.append(jax.nn.sigmoid(logit)[:, 0])
        off += n
    return tuple(out)


if __name__ == "__main__":
    node_dim, hidden_dim = 8, 16
    node_nums = np.array([5, 7], dtype=np.int32)     # two graphs, 12 nodes total
    n_total = int(node_nums.sum())

    key = jax.random.PRNGKey(0)
    k1, k2, k3, k4, k5, k6, kx = jax.random.split(key, 7)
    params = {
        "root1": 0.2 * jax.random.normal(k1, (node_dim, hidden_dim), jnp.float32),
        "bias1": 0.1 * jax.random.normal(k2, (hidden_dim,), jnp.float32),
        "root2": 0.2 * jax.random.normal(k3, (hidden_dim, hidden_dim), jnp.float32),
        "bias2": 0.1 * jax.random.normal(k4, (hidden_dim,), jnp.float32),
        "lin_w": 0.2 * jax.random.normal(k5, (1, 2 * hidden_dim), jnp.float32),
        "lin_b": 0.1 * jax.random.normal(k6, (1,), jnp.float32),
    }
    x = jax.random.normal(kx, (n_total, node_dim), jnp.float32)

    # bidirectional ring edges within each graph (PyG edge_index = [src; tgt])
    src, tgt, off = [], [], 0
    for n in node_nums:
        for i in range(int(n)):
            j = (i + 1) % int(n)
            src += [off + i, off + j]
            tgt += [off + j, off + i]
        off += int(n)
    edge_index = jnp.array([src, tgt], dtype=jnp.int32)

    out = gae_forward(params, x, edge_index, node_nums)
    out = jax.block_until_ready(out)

    ref = gae_forward_ref(params, x, edge_index, node_nums)
    # End-to-end bf16 MXU path (bf16 A, bf16 row-sums, bf16 score writeback) vs a
    # float32-HIGHEST reference: absolute error on sigmoid outputs can reach ~1e-2,
    # so the tolerance is correspondingly looser than a pure-f32 kernel would need.
    for o, r in zip(out, ref):
        np.testing.assert_allclose(np.asarray(o), np.asarray(r), atol=3e-2, rtol=2e-2)

    print("KERNEL_OK")
</pallas_src>

<mosaic_0001>
module attributes {stable_mosaic.version = 11 : i64} {
  func.func @gae_fused_kernel(%arg0: i32, %arg1: i32, %arg2: memref<2x128x128xbf16, #tpu.memory_space<vmem>>, %arg3: memref<2x128x8xf32, #tpu.memory_space<vmem>>, %arg4: memref<8x16xf32, #tpu.memory_space<vmem>>, %arg5: memref<1x16xf32, #tpu.memory_space<vmem>>, %arg6: memref<16x16xf32, #tpu.memory_space<vmem>>, %arg7: memref<1x16xf32, #tpu.memory_space<vmem>>, %arg8: memref<16x1xf32, #tpu.memory_space<vmem>>, %arg9: memref<1x16xf32, #tpu.memory_space<vmem>>, %arg10: memref<1x1xf32, #tpu.memory_space<vmem>>, %arg11: memref<2x128x128xbf16, #tpu.memory_space<vmem>>, %arg12: memref<2x128x1xf32, #tpu.memory_space<vmem>>, %arg13: memref<2x1x128xf32, #tpu.memory_space<vmem>>) attributes {dimension_semantics = [#tpu.dimension_semantics<parallel>, #tpu.dimension_semantics<arbitrary>], iteration_bounds = array<i64: 1, 1>, scalar_prefetch = 0 : i64, scratch_operands = 2 : i64, tpu.core_type = #tpu.core_type<tc>, window_params = [{transform_indices = @transform_0, window_bounds = array<i64: 2, 128, 128>}, {transform_indices = @transform_1, window_bounds = array<i64: 2, 128, 8>}, {pipeline_mode = #tpu.pipeline_mode<synchronous>, transform_indices = @transform_2, window_bounds = array<i64: 8, 16>}, {pipeline_mode = #tpu.pipeline_mode<synchronous>, transform_indices = @transform_3, window_bounds = array<i64: 1, 16>}, {pipeline_mode = #tpu.pipeline_mode<synchronous>, transform_indices = @transform_4, window_bounds = array<i64: 16, 16>}, {pipeline_mode = #tpu.pipeline_mode<synchronous>, transform_indices = @transform_5, window_bounds = array<i64: 1, 16>}, {pipeline_mode = #tpu.pipeline_mode<synchronous>, transform_indices = @transform_6, window_bounds = array<i64: 16, 1>}, {pipeline_mode = #tpu.pipeline_mode<synchronous>, transform_indices = @transform_7, window_bounds = array<i64: 1, 16>}, {pipeline_mode = #tpu.pipeline_mode<synchronous>, transform_indices = @transform_8, window_bounds = array<i64: 1, 1>}, {transform_indices = @transform_9, window_bounds = array<i64: 2, 128, 128>}]} {
    %c0_i32 = arith.constant 0 : i32
    %0 = arith.cmpi eq, %arg1, %c0_i32 : i32
    %1 = arith.extui %0 : i1 to i32
    %c0_i32_0 = arith.constant 0 : i32
    %2 = arith.cmpi ne, %1, %c0_i32_0 : i32
    scf.if %2 {
      %c0_12 = arith.constant 0 : index
      %c0_13 = arith.constant 0 : index
      %c0_14 = arith.constant 0 : index
      %24 = vector.load %arg2[%c0_12, %c0_13, %c0_14] : memref<2x128x128xbf16, #tpu.memory_space<vmem>>, vector<2x128x128xbf16>
      %c0_15 = arith.constant 0 : index
      %c0_16 = arith.constant 0 : index
      %c0_17 = arith.constant 0 : index
      %25 = vector.load %arg3[%c0_15, %c0_16, %c0_17] : memref<2x128x8xf32, #tpu.memory_space<vmem>>, vector<2x128x8xf32>
      %cst_18 = arith.constant dense<0.000000e+00> : vector<2x128xf32>
      %26 = vector.multi_reduction <add>, %25, %cst_18 [2] : vector<2x128x8xf32> to vector<2x128xf32>
      %27 = vector.shape_cast %26 : vector<2x128xf32> to vector<2x128x1xf32>
      %28 = arith.truncf %27 : vector<2x128x1xf32> to vector<2x128x1xbf16>
      %cst_19 = arith.constant dense<0.000000e+00> : vector<2x128x1xf32>
      %29 = tpu.matmul %24, %28, %cst_19 {dimension_numbers = #tpu.dot_dimension_numbers<[2], [1], [1], [2], [0, 0, 0, 1, 1, 2], [0], [0]>} : vector<2x128x128xbf16>, vector<2x128x1xbf16>, vector<2x128x1xf32> -> vector<2x128x1xf32>
      %c0_20 = arith.constant 0 : index
      %c0_21 = arith.constant 0 : index
      %30 = vector.load %arg4[%c0_20, %c0_21] : memref<8x16xf32, #tpu.memory_space<vmem>>, vector<8x16xf32>
      %cst_22 = arith.constant dense<0.000000e+00> : vector<2x128x16xf32>
      %31 = tpu.matmul %25, %30, %cst_22 {dimension_numbers = #tpu.dot_dimension_numbers<[2], [0], [0, 1], [1], [0, 0, 0, 1, 1, 1], [], []>} : vector<2x128x8xf32>, vector<8x16xf32>, vector<2x128x16xf32> -> vector<2x128x16xf32>
      %32 = vector.broadcast %29 : vector<2x128x1xf32> to vector<2x128x16xf32>
      %33 = arith.addf %32, %31 : vector<2x128x16xf32>
      %c0_23 = arith.constant 0 : index
      %c0_24 = arith.constant 0 : index
      %34 = vector.load %arg5[%c0_23, %c0_24] : memref<1x16xf32, #tpu.memory_space<vmem>>, vector<1x16xf32>
      %35 = vector.shape_cast %34 : vector<1x16xf32> to vector<1x1x16xf32>
      %36 = vector.broadcast %35 : vector<1x1x16xf32> to vector<2x128x16xf32>
      %37 = arith.addf %33, %36 : vector<2x128x16xf32>
      %cst_25 = arith.constant 0.000000e+00 : f32
      %38 = vector.broadcast %cst_25 : f32 to vector<2x128x16xf32>
      %39 = arith.maximumf %37, %38 : vector<2x128x16xf32>
      %cst_26 = arith.constant dense<0.000000e+00> : vector<2x128xf32>
      %40 = vector.multi_reduction <add>, %39, %cst_26 [2] : vector<2x128x16xf32> to vector<2x128xf32>
      %41 = vector.shape_cast %40 : vector<2x128xf32> to vector<2x128x1xf32>
      %42 = arith.truncf %41 : vector<2x128x1xf32> to vector<2x128x1xbf16>
      %cst_27 = arith.constant dense<0.000000e+00> : vector<2x128x1xf32>
      %43 = tpu.matmul %24, %42, %cst_27 {dimension_numbers = #tpu.dot_dimension_numbers<[2], [1], [1], [2], [0, 0, 0, 1, 1, 2], [0], [0]>} : vector<2x128x128xbf16>, vector<2x128x1xbf16>, vector<2x128x1xf32> -> vector<2x128x1xf32>
      %c0_28 = arith.constant 0 : index
      %c0_29 = arith.constant 0 : index
      %44 = vector.load %arg6[%c0_28, %c0_29] : memref<16x16xf32, #tpu.memory_space<vmem>>, vector<16x16xf32>
      %cst_30 = arith.constant dense<0.000000e+00> : vector<2x128x16xf32>
      %45 = tpu.matmul %39, %44, %cst_30 {dimension_numbers = #tpu.dot_dimension_numbers<[2], [0], [0, 1], [1], [0, 0, 0, 1, 1, 1], [], []>} : vector<2x128x16xf32>, vector<16x16xf32>, vector<2x128x16xf32> -> vector<2x128x16xf32>
      %46 = vector.broadcast %43 : vector<2x128x1xf32> to vector<2x128x16xf32>
      %47 = arith.addf %46, %45 : vector<2x128x16xf32>
      %c0_31 = arith.constant 0 : index
      %c0_32 = arith.constant 0 : index
      %48 = vector.load %arg7[%c0_31, %c0_32] : memref<1x16xf32, #tpu.memory_space<vmem>>, vector<1x16xf32>
      %49 = vector.shape_cast %48 : vector<1x16xf32> to vector<1x1x16xf32>
      %50 = vector.broadcast %49 : vector<1x1x16xf32> to vector<2x128x16xf32>
      %51 = arith.addf %47, %50 : vector<2x128x16xf32>
      %cst_33 = arith.constant 0.000000e+00 : f32
      %52 = vector.broadcast %cst_33 : f32 to vector<2x128x16xf32>
      %53 = arith.maximumf %51, %52 : vector<2x128x16xf32>
      %c0_34 = arith.constant 0 : index
      %c0_35 = arith.constant 0 : index
      %54 = vector.load %arg8[%c0_34, %c0_35] : memref<16x1xf32, #tpu.memory_space<vmem>>, vector<16x1xf32>
      %cst_36 = arith.constant dense<0.000000e+00> : vector<2x128x1xf32>
      %55 = tpu.matmul %53, %54, %cst_36 {dimension_numbers = #tpu.dot_dimension_numbers<[2], [0], [0, 1], [1], [0, 0, 0, 1, 1, 1], [], []>} : vector<2x128x16xf32>, vector<16x1xf32>, vector<2x128x1xf32> -> vector<2x128x1xf32>
      %c0_37 = arith.constant 0 : index
      %c0_38 = arith.constant 0 : index
      %c0_39 = arith.constant 0 : index
      %56 = vector.load %arg12[%c0_37, %c0_38, %c0_39] : memref<2x128x1xf32, #tpu.memory_space<vmem>>, vector<2x128x1xf32>
      tpu.vector_store %arg12[%c0_37, %c0_38, %c0_39], %55 {strides = array<i32>} : memref<2x128x1xf32, #tpu.memory_space<vmem>>, vector<2x128x1xf32>,
      %c0_40 = arith.constant 0 : index
      %c0_41 = arith.constant 0 : index
      %57 = vector.load %arg9[%c0_40, %c0_41] : memref<1x16xf32, #tpu.memory_space<vmem>>, vector<1x16xf32>
      %58 = vector.shape_cast %57 : vector<1x16xf32> to vector<1x1x16xf32>
      %59 = vector.shape_cast %58 : vector<1x1x16xf32> to vector<1x1x16xf32>
      %60 = vector.broadcast %59 : vector<1x1x16xf32> to vector<2x1x16xf32>
      %cst_42 = arith.constant dense<0.000000e+00> : vector<2x1x128xf32>
      %61 = tpu.matmul %60, %53, %cst_42 {dimension_numbers = #tpu.dot_dimension_numbers<[2], [2], [1], [1], [0, 0, 0, 1, 1, 1], [0], [0]>} : vector<2x1x16xf32>, vector<2x128x16xf32>, vector<2x1x128xf32> -> vector<2x1x128xf32>
      %c0_43 = arith.constant 0 : index
      %c0_44 = arith.constant 0 : index
      %c0_45 = arith.constant 0 : index
      %62 = vector.load %arg13[%c0_43, %c0_44, %c0_45] : memref<2x1x128xf32, #tpu.memory_space<vmem>>, vector<2x1x128xf32>
      tpu.vector_store %arg13[%c0_43, %c0_44, %c0_45], %61 {strides = array<i32>} : memref<2x1x128xf32, #tpu.memory_space<vmem>>, vector<2x1x128xf32>,
    } else {
    }
    %c128_i32 = arith.constant 128 : i32
    %3 = arith.muli %arg1, %c128_i32 : i32
    %4 = tpu.assume_multiple %3, 128 : i32
    %c0 = arith.constant 0 : index
    %c0_1 = arith.constant 0 : index
    %c0_2 = arith.constant 0 : index
    %5 = vector.load %arg12[%c0, %c0_1, %c0_2] : memref<2x128x1xf32, #tpu.memory_space<vmem>>, vector<2x128x1xf32>
    %c0_3 = arith.constant 0 : index
    %c0_4 = arith.constant 0 : index
    %6 = arith.index_cast %4 : i32 to index
    %7 = vector.load %arg13[%c0_3, %c0_4, %6] : memref<2x1x128xf32, #tpu.memory_space<vmem>>, vector<2x1x128xf32>
    %8 = vector.broadcast %5 : vector<2x128x1xf32> to vector<2x128x128xf32>
    %9 = vector.broadcast %7 : vector<2x1x128xf32> to vector<2x128x128xf32>
    %10 = arith.addf %8, %9 : vector<2x128x128xf32>
    %c0_5 = arith.constant 0 : index
    %c0_6 = arith.constant 0 : index
    %11 = vector.load %arg10[%c0_5, %c0_6] : memref<1x1xf32, #tpu.memory_space<vmem>>, vector<1x1xf32>
    %12 = vector.shape_cast %11 : vector<1x1xf32> to vector<1x1x1xf32>
    %13 = vector.broadcast %12 : vector<1x1x1xf32> to vector<2x128x128xf32>
    %14 = arith.addf %10, %13 : vector<2x128x128xf32>
    %cst = arith.constant 5.000000e-01 : f32
    %15 = vector.broadcast %cst : f32 to vector<2x128x128xf32>
    %16 = arith.mulf %15, %14 : vector<2x128x128xf32>
    %17 = math.tanh %16 : vector<2x128x128xf32>
    %cst_7 = arith.constant 5.000000e-01 : f32
    %18 = vector.broadcast %cst_7 : f32 to vector<2x128x128xf32>
    %19 = arith.mulf %18, %17 : vector<2x128x128xf32>
    %cst_8 = arith.constant 5.000000e-01 : f32
    %20 = vector.broadcast %cst_8 : f32 to vector<2x128x128xf32>
    %21 = arith.addf %19, %20 : vector<2x128x128xf32>
    %22 = arith.truncf %21 : vector<2x128x128xf32> to vector<2x128x128xbf16>
    %c0_9 = arith.constant 0 : index
    %c0_10 = arith.constant 0 : index
    %c0_11 = arith.constant 0 : index
    %23 = vector.load %arg11[%c0_9, %c0_10, %c0_11] : memref<2x128x128xbf16, #tpu.memory_space<vmem>>, vector<2x128x128xbf16>
    tpu.vector_store %arg11[%c0_9, %c0_10, %c0_11], %22 {strides = array<i32>} : memref<2x128x128xbf16, #tpu.memory_space<vmem>>, vector<2x128x128xbf16>,
    return
  }
  func.func @transform_0(%arg0: i32, %arg1: i32) -> (i32, i32, i32) {
    %c0_i32 = arith.constant 0 : i32
    %c0_i32_0 = arith.constant 0 : i32
    %c0_i32_1 = arith.constant 0 : i32
    return %arg0, %c0_i32, %c0_i32_0 : i32, i32, i32
  }
  func.func @transform_1(%arg0: i32, %arg1: i32) -> (i32, i32, i32) {
    %c0_i32 = arith.constant 0 : i32
    %c0_i32_0 = arith.constant 0 : i32
    %c0_i32_1 = arith.constant 0 : i32
    return %arg0, %c0_i32, %c0_i32_0 : i32, i32, i32
  }
  func.func @transform_2(%arg0: i32, %arg1: i32) -> (i32, i32) {
    %c0_i32 = arith.constant 0 : i32
    %c0_i32_0 = arith.constant 0 : i32
    %c0_i32_1 = arith.constant 0 : i32
    return %c0_i32, %c0_i32_0 : i32, i32
  }
  func.func @transform_3(%arg0: i32, %arg1: i32) -> (i32, i32) {
    %c0_i32 = arith.constant 0 : i32
    %c0_i32_0 = arith.constant 0 : i32
    %c0_i32_1 = arith.constant 0 : i32
    return %c0_i32, %c0_i32_0 : i32, i32
  }
  func.func @transform_4(%arg0: i32, %arg1: i32) -> (i32, i32) {
    %c0_i32 = arith.constant 0 : i32
    %c0_i32_0 = arith.constant 0 : i32
    %c0_i32_1 = arith.constant 0 : i32
    return %c0_i32, %c0_i32_0 : i32, i32
  }
  func.func @transform_5(%arg0: i32, %arg1: i32) -> (i32, i32) {
    %c0_i32 = arith.constant 0 : i32
    %c0_i32_0 = arith.constant 0 : i32
    %c0_i32_1 = arith.constant 0 : i32
    return %c0_i32, %c0_i32_0 : i32, i32
  }
  func.func @transform_6(%arg0: i32, %arg1: i32) -> (i32, i32) {
    %c0_i32 = arith.constant 0 : i32
    %c0_i32_0 = arith.constant 0 : i32
    %c0_i32_1 = arith.constant 0 : i32
    return %c0_i32, %c0_i32_0 : i32, i32
  }
  func.func @transform_7(%arg0: i32, %arg1: i32) -> (i32, i32) {
    %c0_i32 = arith.constant 0 : i32
    %c0_i32_0 = arith.constant 0 : i32
    %c0_i32_1 = arith.constant 0 : i32
    return %c0_i32, %c0_i32_0 : i32, i32
  }
  func.func @transform_8(%arg0: i32, %arg1: i32) -> (i32, i32) {
    %c0_i32 = arith.constant 0 : i32
    %c0_i32_0 = arith.constant 0 : i32
    %c0_i32_1 = arith.constant 0 : i32
    return %c0_i32, %c0_i32_0 : i32, i32
  }
  func.func @transform_9(%arg0: i32, %arg1: i32) -> (i32, i32, i32) {
    %c0_i32 = arith.constant 0 : i32
    %c0_i32_0 = arith.constant 0 : i32
    return %arg0, %c0_i32, %arg1 : i32, i32, i32
  }
}

</mosaic_0001>

<llo_original>
// kernel: tpu_custom_call.1
$region0: #{tpu_custom_call.1}
  #allocation0 [shape = 'u32[]', space=smem, size = 0x4, offset = 0x4, fixed_abs, tag = 'smem constant byte address 0x4 - core index']
  #allocation1 [shape = 'u32[72,128]{1,0:T(1,128)}', space=vmem, size = 0x9000, scoped, tag = 'internal scratch']
  #allocation2 [shape = 'f32[2,128,1]{2,1,0:T(8,128)}', space=vmem, size = 0x20000, scoped, tag = 'scratch operand']
  #allocation3 [shape = 'f32[2,1,128]{2,1,0:T(1,128)}', space=vmem, size = 0x400, scoped, tag = 'scratch operand']
  #allocation4 [shape = 'f32[1,1]{1,0:T(1,128)S(1)}', space=vmem, size = 0x200, scoped, tag = 'scoped memory for tpu_custom_call.1']
  %s0 = inlined_call_operand.vmem [shape: bf16[2,128,128], index: 0, kind: input, shape index: {}]
  %s1 = inlined_call_operand.vmem [shape: f32[2,128,8], index: 1, kind: input, shape index: {}]
  %s2 = inlined_call_operand.vmem [shape: f32[8,16], index: 2, kind: input, shape index: {}]
  %s3 = inlined_call_operand.vmem [shape: f32[1,16], index: 3, kind: input, shape index: {}]
  %s4 = inlined_call_operand.vmem [shape: f32[16,16], index: 4, kind: input, shape index: {}]
  %s5 = inlined_call_operand.vmem [shape: f32[1,16], index: 5, kind: input, shape index: {}]
  %s6 = inlined_call_operand.vmem [shape: f32[16,1], index: 6, kind: input, shape index: {}]
  %s7 = inlined_call_operand.vmem [shape: f32[1,16], index: 7, kind: input, shape index: {}]
  %s8 = inlined_call_operand.<no memory space> [shape: f32[1,1], index: 8, kind: input, shape index: {}]
  %s9 = inlined_call_operand.hbm [shape: bf16[2,128,128], index: 9, kind: output, shape index: {}]
  %s10 = sld [smem:[#allocation0]]
  $region50: #{tpu_custom_call.1} parent=0
    _
  %s12 = ssub.s32 1, %s10
  %s13 = scalar_select 0, %s12, %s10
  %v14 = vstv %s8
  %15 = vst [vmem:[#allocation4] sm:$0x1] %v14
  $region1: #{tpu_custom_call.1} parent=0
    #allocation5 [shape = 'u8[65536]{0}', space=vmem, size = 0x10000, scoped, tag = 'output window, operand 0, single buffered']
    #allocation6 [shape = 's32[1]{0}', space=sflag, size = 0x4, scoped, tag = 'scoped memory for tpu_custom_call.1']
    %16 = vsyncpa [#allocation6], 0
    // Predicated region
    $region2: #{tpu_custom_call.1} parent=1 // pred_check
      _
    $region3: #{tpu_custom_call.1} parent=1 // pred_check_branch
      %18 = sbr.rel (0) target = $region5
    $region4: #{tpu_custom_call.1} parent=1 // pred_region
      _
    $region5: #{tpu_custom_call.1} parent=1 // pred_fallthru
      _
    // Predicated region
    $region6: #{tpu_custom_call.1} parent=1 // pred_check
      _
    $region7: #{tpu_custom_call.1} parent=1 // pred_check_branch
      %20 = sbr.rel (0) target = $region9
    $region8: #{tpu_custom_call.1} parent=1 // pred_region
      _
    $region9: #{tpu_custom_call.1} parent=1 // pred_fallthru
      _
    // Predicated region
    $region10: #{tpu_custom_call.1} parent=1 // pred_check
      _
    $region11: #{tpu_custom_call.1} parent=1 // pred_check_branch
      %22 = sbr.rel (0) target = $region13
    $region12: #{tpu_custom_call.1} parent=1 // pred_region
      _
    $region13: #{tpu_custom_call.1} parent=1 // pred_fallthru
      _
    // Predicated region
    $region14: #{tpu_custom_call.1} parent=1 // pred_check
      _
    $region15: #{tpu_custom_call.1} parent=1 // pred_check_branch
      %24 = sbr.rel (0) target = $region17
    $region16: #{tpu_custom_call.1} parent=1 // pred_region
      _
    $region17: #{tpu_custom_call.1} parent=1 // pred_fallthru
      _
    // Predicated region
    $region18: #{tpu_custom_call.1} parent=1 // pred_check
      _
    $region19: #{tpu_custom_call.1} parent=1 // pred_check_branch
      %26 = sbr.rel (0) target = $region21
    $region20: #{tpu_custom_call.1} parent=1 // pred_region
      _
    $region21: #{tpu_custom_call.1} parent=1 // pred_fallthru
      _
    // Predicated region
    $region22: #{tpu_custom_call.1} parent=1 // pred_check
      _
    $region23: #{tpu_custom_call.1} parent=1 // pred_check_branch
      %28 = sbr.rel (0) target = $region25
    $region24: #{tpu_custom_call.1} parent=1 // pred_region
      _
    $region25: #{tpu_custom_call.1} parent=1 // pred_fallthru
      _
    // Predicated region
    $region26: #{tpu_custom_call.1} parent=1 // pred_check
      _
    $region27: #{tpu_custom_call.1} parent=1 // pred_check_branch
      %30 = sbr.rel (0) target = $region29
    $region28: #{tpu_custom_call.1} parent=1 // pred_region
      _
    $region29: #{tpu_custom_call.1} parent=1 // pred_fallthru
      _
    // Predicated region
    $region30: #{tpu_custom_call.1} parent=1 // pred_check
      _
    $region31: #{tpu_custom_call.1} parent=1 // pred_check_branch
      %32 = sbr.rel (0) target = $region33
    $region32: #{tpu_custom_call.1} parent=1 // pred_region
      _
    $region33: #{tpu_custom_call.1} parent=1 // pred_fallthru
      _
    // Predicated region
    $region34: #{tpu_custom_call.1} parent=1 // pred_check
      _
    $region35: #{tpu_custom_call.1} parent=1 // pred_check_branch
      %34 = sbr.rel (0) target = $region37
    $region36: #{tpu_custom_call.1} parent=1 // pred_region
      _
    $region37: #{tpu_custom_call.1} parent=1 // pred_fallthru
      _
    %p35 = scmp.eq.s32.totalorder 0, 0
    // Predicated region
    $region38: #{tpu_custom_call.1} parent=1 // pred_check
      %p36 = pneg %p35
    $region39: #{tpu_custom_call.1} parent=1 // pred_check_branch
      %38 = sbr.rel (%p36) target = $region41
    $region40: #{tpu_custom_call.1} parent=1 // pred_region
      %v39 = vld [vmem:[%s0] sm:$0xf]
      %v40 = vld [vmem:[%s0 + $0x4] sm:$0xf]
      %v41 = vld [vmem:[%s0 + $0x8] sm:$0xf]
      %v42 = vld [vmem:[%s0 + $0xc] sm:$0xf]
      %v43 = vld [vmem:[%s0 + $0x10] sm:$0xf]
      %v44 = vld [vmem:[%s0 + $0x14] sm:$0xf]
      %v45 = vld [vmem:[%s0 + $0x18] sm:$0xf]
      %v46 = vld [vmem:[%s0 + $0x1c] sm:$0xf]
      %v47 = vld [vmem:[%s0 + $0x20] sm:$0xf]
      %v48 = vld [vmem:[%s0 + $0x24] sm:$0xf]
      %v49 = vld [vmem:[%s0 + $0x28] sm:$0xf]
      %v50 = vld [vmem:[%s0 + $0x2c] sm:$0xf]
      %v51 = vld [vmem:[%s0 + $0x30] sm:$0xf]
      %v52 = vld [vmem:[%s0 + $0x34] sm:$0xf]
      %v53 = vld [vmem:[%s0 + $0x38] sm:$0xf]
      %v54 = vld [vmem:[%s0 + $0x3c] sm:$0xf]
      %v55 = vld [vmem:[%s0 + $0x40] sm:$0xf]
      %v56 = vld [vmem:[%s0 + $0x44] sm:$0xf]
      %v57 = vld [vmem:[%s0 + $0x48] sm:$0xf]
      %v58 = vld [vmem:[%s0 + $0x4c] sm:$0xf]
      %v59 = vld [vmem:[%s0 + $0x50] sm:$0xf]
      %v60 = vld [vmem:[%s0 + $0x54] sm:$0xf]
      %v61 = vld [vmem:[%s0 + $0x58] sm:$0xf]
      %v62 = vld [vmem:[%s0 + $0x5c] sm:$0xf]
      %v63 = vld [vmem:[%s0 + $0x60] sm:$0xf]
      %v64 = vld [vmem:[%s0 + $0x64] sm:$0xf]
      %v65 = vld [vmem:[%s0 + $0x68] sm:$0xf]
      %v66 = vld [vmem:[%s0 + $0x6c] sm:$0xf]
      %v67 = vld [vmem:[%s0 + $0x70] sm:$0xf]
      %v68 = vld [vmem:[%s0 + $0x74] sm:$0xf]
      %v69 = vld [vmem:[%s0 + $0x78] sm:$0xf]
      %v70 = vld [vmem:[%s0 + $0x7c] sm:$0xf]
      %v71 = vld [vmem:[%s1] sm:$0xff]
      %v72 = vld [vmem:[%s1 + $0x8] sm:$0xff]
      %v73 = vld [vmem:[%s1 + $0x10] sm:$0xff]
      %v74 = vld [vmem:[%s1 + $0x18] sm:$0xff]
      %v75 = vld [vmem:[%s1 + $0x20] sm:$0xff]
      %v76 = vld [vmem:[%s1 + $0x28] sm:$0xff]
      %v77 = vld [vmem:[%s1 + $0x30] sm:$0xff]
      %v78 = vld [vmem:[%s1 + $0x38] sm:$0xff]
      %v79 = vld [vmem:[%s1 + $0x40] sm:$0xff]
      %v80 = vld [vmem:[%s1 + $0x48] sm:$0xff]
      %v81 = vld [vmem:[%s1 + $0x50] sm:$0xff]
      %v82 = vld [vmem:[%s1 + $0x58] sm:$0xff]
      %v83 = vld [vmem:[%s1 + $0x60] sm:$0xff]
      %v84 = vld [vmem:[%s1 + $0x68] sm:$0xff]
      %v85 = vld [vmem:[%s1 + $0x70] sm:$0xff]
      %v86 = vld [vmem:[%s1 + $0x78] sm:$0xff]
      %v87 = vld [vmem:[%s1 + $0x80] sm:$0xff]
      %v88 = vld [vmem:[%s1 + $0x88] sm:$0xff]
      %v89 = vld [vmem:[%s1 + $0x90] sm:$0xff]
      %v90 = vld [vmem:[%s1 + $0x98] sm:$0xff]
      %v91 = vld [vmem:[%s1 + $0xa0] sm:$0xff]
      %v92 = vld [vmem:[%s1 + $0xa8] sm:$0xff]
      %v93 = vld [vmem:[%s1 + $0xb0] sm:$0xff]
      %v94 = vld [vmem:[%s1 + $0xb8] sm:$0xff]
      %v95 = vld [vmem:[%s1 + $0xc0] sm:$0xff]
      %v96 = vld [vmem:[%s1 + $0xc8] sm:$0xff]
      %v97 = vld [vmem:[%s1 + $0xd0] sm:$0xff]
      %v98 = vld [vmem:[%s1 + $0xd8] sm:$0xff]
      %v99 = vld [vmem:[%s1 + $0xe0] sm:$0xff]
      %v100 = vld [vmem:[%s1 + $0xe8] sm:$0xff]
      %v101 = vld [vmem:[%s1 + $0xf0] sm:$0xff]
      %v102 = vld [vmem:[%s1 + $0xf8] sm:$0xff]
      %vm103 = vcmask 64512
      %v104 = vsel %vm103, %v71, 0.0
      %105 = vadd.xlane.f32.xlu0 %v104
      %v106 = vpop.xlane.xlu0 %105
      %v107 = vsel %vm103, %v72, 0.0
      %108 = vadd.xlane.f32.xlu0 %v107
      %v109 = vpop.xlane.xlu0 %108
      %v110 = vsel %vm103, %v73, 0.0
      %111 = vadd.xlane.f32.xlu0 %v110
      %v112 = vpop.xlane.xlu0 %111
      %v113 = vsel %vm103, %v74, 0.0
      %114 = vadd.xlane.f32.xlu0 %v113
      %v115 = vpop.xlane.xlu0 %114
      %v116 = vsel %vm103, %v75, 0.0
      %117 = vadd.xlane.f32.xlu0 %v116
      %v118 = vpop.xlane.xlu0 %117
      %v119 = vsel %vm103, %v76, 0.0
      %120 = vadd.xlane.f32.xlu0 %v119
      %v121 = vpop.xlane.xlu0 %120
      %v122 = vsel %vm103, %v77, 0.0
      %123 = vadd.xlane.f32.xlu0 %v122
      %v124 = vpop.xlane.xlu0 %123
      %v125 = vsel %vm103, %v78, 0.0
      %126 = vadd.xlane.f32.xlu0 %v125
      %v127 = vpop.xlane.xlu0 %126
      %v128 = vsel %vm103, %v79, 0.0
      %129 = vadd.xlane.f32.xlu0 %v128
      %v130 = vpop.xlane.xlu0 %129
      %v131 = vsel %vm103, %v80, 0.0
      %132 = vadd.xlane.f32.xlu0 %v131
      %v133 = vpop.xlane.xlu0 %132
      %v134 = vsel %vm103, %v81, 0.0
      %135 = vadd.xlane.f32.xlu0 %v134
      %v136 = vpop.xlane.xlu0 %135
      %v137 = vsel %vm103, %v82, 0.0
      %138 = vadd.xlane.f32.xlu0 %v137
      %v139 = vpop.xlane.xlu0 %138
      %v140 = vsel %vm103, %v83, 0.0
      %141 = vadd.xlane.f32.xlu0 %v140
      %v142 = vpop.xlane.xlu0 %141
      %v143 = vsel %vm103, %v84, 0.0
      %144 = vadd.xlane.f32.xlu0 %v143
      %v145 = vpop.xlane.xlu0 %144
      %v146 = vsel %vm103, %v85, 0.0
      %147 = vadd.xlane.f32.xlu0 %v146
      %v148 = vpop.xlane.xlu0 %147
      %v149 = vsel %vm103, %v86, 0.0
      %150 = vadd.xlane.f32.xlu0 %v149
      %v151 = vpop.xlane.xlu0 %150
      %v152 = vsel %vm103, %v87, 0.0
      %153 = vadd.xlane.f32.xlu0 %v152
      %v154 = vpop.xlane.xlu0 %153
      %v155 = vsel %vm103, %v88, 0.0
      %156 = vadd.xlane.f32.xlu0 %v155
      %v157 = vpop.xlane.xlu0 %156
      %v158 = vsel %vm103, %v89, 0.0
      %159 = vadd.xlane.f32.xlu0 %v158
      %v160 = vpop.xlane.xlu0 %159
      %v161 = vsel %vm103, %v90, 0.0
      %162 = vadd.xlane.f32.xlu0 %v161
      %v163 = vpop.xlane.xlu0 %162
      %v164 = vsel %vm103, %v91, 0.0
      %165 = vadd.xlane.f32.xlu0 %v164
      %v166 = vpop.xlane.xlu0 %165
      %v167 = vsel %vm103, %v92, 0.0
      %168 = vadd.xlane.f32.xlu0 %v167
      %v169 = vpop.xlane.xlu0 %168
      %v170 = vsel %vm103, %v93, 0.0
      %171 = vadd.xlane.f32.xlu0 %v170
      %v172 = vpop.xlane.xlu0 %171
      %v173 = vsel %vm103, %v94, 0.0
      %174 = vadd.xlane.f32.xlu0 %v173
      %v175 = vpop.xlane.xlu0 %174
      %v176 = vsel %vm103, %v95, 0.0
      %177 = vadd.xlane.f32.xlu0 %v176
      %v178 = vpop.xlane.xlu0 %177
      %v179 = vsel %vm103, %v96, 0.0
      %180 = vadd.xlane.f32.xlu0 %v179
      %v181 = vpop.xlane.xlu0 %180
      %v182 = vsel %vm103, %v97, 0.0
      %183 = vadd.xlane.f32.xlu0 %v182
      %v184 = vpop.xlane.xlu0 %183
      %v185 = vsel %vm103, %v98, 0.0
      %186 = vadd.xlane.f32.xlu0 %v185
      %v187 = vpop.xlane.xlu0 %186
      %v188 = vsel %vm103, %v99, 0.0
      %189 = vadd.xlane.f32.xlu0 %v188
      %v190 = vpop.xlane.xlu0 %189
      %v191 = vsel %vm103, %v100, 0.0
      %192 = vadd.xlane.f32.xlu0 %v191
      %v193 = vpop.xlane.xlu0 %192
      %v194 = vsel %vm103, %v101, 0.0
      %195 = vadd.xlane.f32.xlu0 %v194
      %v196 = vpop.xlane.xlu0 %195
      %v197 = vsel %vm103, %v102, 0.0
      %198 = vadd.xlane.f32.xlu0 %v197
      %v199 = vpop.xlane.xlu0 %198
      %v200 = vpack.c.bf16 %v106, %v106
      %v201 = vpack.c.bf16 %v109, %v109
      %v202 = vpack.c.bf16 %v112, %v112
      %v203 = vpack.c.bf16 %v115, %v115
      %v204 = vpack.c.bf16 %v118, %v118
      %v205 = vpack.c.bf16 %v121, %v121
      %v206 = vpack.c.bf16 %v124, %v124
      %v207 = vpack.c.bf16 %v127, %v127
      %v208 = vpack.c.bf16 %v130, %v130
      %v209 = vpack.c.bf16 %v133, %v133
      %v210 = vpack.c.bf16 %v136, %v136
      %v211 = vpack.c.bf16 %v139, %v139
      %v212 = vpack.c.bf16 %v142, %v142
      %v213 = vpack.c.bf16 %v145, %v145
      %v214 = vpack.c.bf16 %v148, %v148
      %v215 = vpack.c.bf16 %v151, %v151
      %v216 = vpack.c.bf16 %v154, %v154
      %v217 = vpack.c.bf16 %v157, %v157
      %v218 = vpack.c.bf16 %v160, %v160
      %v219 = vpack.c.bf16 %v163, %v163
      %v220 = vpack.c.bf16 %v166, %v166
      %v221 = vpack.c.bf16 %v169, %v169
      %v222 = vpack.c.bf16 %v172, %v172
      %v223 = vpack.c.bf16 %v175, %v175
      %v224 = vpack.c.bf16 %v178, %v178
      %v225 = vpack.c.bf16 %v181, %v181
      %v226 = vpack.c.bf16 %v184, %v184
      %v227 = vpack.c.bf16 %v187, %v187
      %v228 = vpack.c.bf16 %v190, %v190
      %v229 = vpack.c.bf16 %v193, %v193
      %v230 = vpack.c.bf16 %v196, %v196
      %v231 = vpack.c.bf16 %v199, %v199
      %v248 = vunpack.c.l.b16 %v39
      %v249 = vunpack.c.l.b16 %v40
      %v250 = vunpack.c.l.b16 %v41
      %v251 = vunpack.c.l.b16 %v42
      %v252 = vunpack.c.l.b16 %v43
      %v253 = vunpack.c.l.b16 %v44
      %v254 = vunpack.c.l.b16 %v45
      %v255 = vunpack.c.l.b16 %v46
      %v256 = vunpack.c.l.b16 %v47
      %v257 = vunpack.c.l.b16 %v48
      %v258 = vunpack.c.l.b16 %v49
      %v259 = vunpack.c.l.b16 %v50
      %v260 = vunpack.c.l.b16 %v51
      %v261 = vunpack.c.l.b16 %v52
      %v262 = vunpack.c.l.b16 %v53
      %v263 = vunpack.c.l.b16 %v54
      %v264 = vpack.c.b16 %v249, %v248
      %v265 = vpack.c.b16 %v251, %v250
      %v266 = vpack.c.b16 %v253, %v252
      %v267 = vpack.c.b16 %v255, %v254
      %v268 = vpack.c.b16 %v257, %v256
      %v269 = vpack.c.b16 %v259, %v258
      %v270 = vpack.c.b16 %v261, %v260
      %v271 = vpack.c.b16 %v263, %v262
      %v296 = vunpack.c.l.b16 %v200
      %v297 = vunpack.c.l.b16 %v201
      %v298 = vunpack.c.l.b16 %v202
      %v299 = vunpack.c.l.b16 %v203
      %v300 = vunpack.c.l.b16 %v204
      %v301 = vunpack.c.l.b16 %v205
      %v302 = vunpack.c.l.b16 %v206
      %v303 = vunpack.c.l.b16 %v207
      %v304 = vunpack.c.l.b16 %v208
      %v305 = vunpack.c.l.b16 %v209
      %v306 = vunpack.c.l.b16 %v210
      %v307 = vunpack.c.l.b16 %v211
      %v308 = vunpack.c.l.b16 %v212
      %v309 = vunpack.c.l.b16 %v213
      %v310 = vunpack.c.l.b16 %v214
      %v311 = vunpack.c.l.b16 %v215
      %v312 = vpack.c.b16 %v297, %v296
      %v313 = vpack.c.b16 %v299, %v298
      %v314 = vpack.c.b16 %v301, %v300
      %v315 = vpack.c.b16 %v303, %v302
      %v316 = vpack.c.b16 %v305, %v304
      %v317 = vpack.c.b16 %v307, %v306
      %v318 = vpack.c.b16 %v309, %v308
      %v319 = vpack.c.b16 %v311, %v310
      %328 = vmatpush.bf16.msra.mxu0 %v319
      %329 = vmatpush.bf16.msra.mxu0 %v318
      %330 = vmatpush.bf16.msra.mxu0 %v317
      %331 = vmatpush.bf16.msra.mxu0 %v316
      %332 = vmatpush.bf16.msra.mxu0 %v315
      %333 = vmatpush.bf16.msra.mxu0 %v314
      %334 = vmatpush.bf16.msra.mxu0 %v313
      %335 = vmatpush.bf16.msra.mxu0 %v312
      %336 = vmatmul.bf16.gmra.mxu0 %v264
      %v337 = vpop.f32.mrf.mxu0
      %v338 = vadd.f32 0.0, %v337
      %v339 = vpop.f32.mrf.mxu0
      %v340 = vadd.f32 0.0, %v339
      %341 = vmatmul.bf16.gmra.mxu0 %v265
      %v342 = vpop.f32.mrf.mxu0
      %v343 = vadd.f32 0.0, %v342
      %v344 = vpop.f32.mrf.mxu0
      %v345 = vadd.f32 0.0, %v344
      %346 = vmatmul.bf16.gmra.mxu0 %v266
      %v347 = vpop.f32.mrf.mxu0
      %v348 = vadd.f32 0.0, %v347
      %v349 = vpop.f32.mrf.mxu0
      %v350 = vadd.f32 0.0, %v349
      %351 = vmatmul.bf16.gmra.mxu0 %v267
      %v352 = vpop.f32.mrf.mxu0
      %v353 = vadd.f32 0.0, %v352
      %v354 = vpop.f32.mrf.mxu0
      %v355 = vadd.f32 0.0, %v354
      %356 = vmatmul.bf16.gmra.mxu0 %v268
      %v357 = vpop.f32.mrf.mxu0
      %v358 = vadd.f32 0.0, %v357
      %v359 = vpop.f32.mrf.mxu0
      %v360 = vadd.f32 0.0, %v359
      %361 = vmatmul.bf16.gmra.mxu0 %v269
      %v362 = vpop.f32.mrf.mxu0
      %v363 = vadd.f32 0.0, %v362
      %v364 = vpop.f32.mrf.mxu0
      %v365 = vadd.f32 0.0, %v364
      %366 = vmatmul.bf16.gmra.mxu0 %v270
      %v367 = vpop.f32.mrf.mxu0
      %v368 = vadd.f32 0.0, %v367
      %v369 = vpop.f32.mrf.mxu0
      %v370 = vadd.f32 0.0, %v369
      %371 = vmatmul.bf16.gmra.mxu0 %v271
      %v372 = vpop.f32.mrf.mxu0
      %v373 = vadd.f32 0.0, %v372
      %v374 = vpop.f32.mrf.mxu0
      %v375 = vadd.f32 0.0, %v374
      %376 = vdwg.mxu0
      %v393 = vunpack.c.l.b16 %v55
      %v394 = vunpack.c.l.b16 %v56
      %v395 = vunpack.c.l.b16 %v57
      %v396 = vunpack.c.l.b16 %v58
      %v397 = vunpack.c.l.b16 %v59
      %v398 = vunpack.c.l.b16 %v60
      %v399 = vunpack.c.l.b16 %v61
      %v400 = vunpack.c.l.b16 %v62
      %v401 = vunpack.c.l.b16 %v63
      %v402 = vunpack.c.l.b16 %v64
      %v403 = vunpack.c.l.b16 %v65
      %v404 = vunpack.c.l.b16 %v66
      %v405 = vunpack.c.l.b16 %v67
      %v406 = vunpack.c.l.b16 %v68
      %v407 = vunpack.c.l.b16 %v69
      %v408 = vunpack.c.l.b16 %v70
      %v409 = vpack.c.b16 %v394, %v393
      %v410 = vpack.c.b16 %v396, %v395
      %v411 = vpack.c.b16 %v398, %v397
      %v412 = vpack.c.b16 %v400, %v399
      %v413 = vpack.c.b16 %v402, %v401
      %v414 = vpack.c.b16 %v404, %v403
      %v415 = vpack.c.b16 %v406, %v405
      %v416 = vpack.c.b16 %v408, %v407
      %v441 = vunpack.c.l.b16 %v216
      %v442 = vunpack.c.l.b16 %v217
      %v443 = vunpack.c.l.b16 %v218
      %v444 = vunpack.c.l.b16 %v219
      %v445 = vunpack.c.l.b16 %v220
      %v446 = vunpack.c.l.b16 %v221
      %v447 = vunpack.c.l.b16 %v222
      %v448 = vunpack.c.l.b16 %v223
      %v449 = vunpack.c.l.b16 %v224
      %v450 = vunpack.c.l.b16 %v225
      %v451 = vunpack.c.l.b16 %v226
      %v452 = vunpack.c.l.b16 %v227
      %v453 = vunpack.c.l.b16 %v228
      %v454 = vunpack.c.l.b16 %v229
      %v455 = vunpack.c.l.b16 %v230
      %v456 = vunpack.c.l.b16 %v231
      %v457 = vpack.c.b16 %v442, %v441
      %v458 = vpack.c.b16 %v444, %v443
      %v459 = vpack.c.b16 %v446, %v445
      %v460 = vpack.c.b16 %v448, %v447
      %v461 = vpack.c.b16 %v450, %v449
      %v462 = vpack.c.b16 %v452, %v451
      %v463 = vpack.c.b16 %v454, %v453
      %v464 = vpack.c.b16 %v456, %v455
      %473 = vmatpush.bf16.msra.mxu0 %v464
      %474 = vmatpush.bf16.msra.mxu0 %v463
      %475 = vmatpush.bf16.msra.mxu0 %v462
      %476 = vmatpush.bf16.msra.mxu0 %v461
      %477 = vmatpush.bf16.msra.mxu0 %v460
      %478 = vmatpush.bf16.msra.mxu0 %v459
      %479 = vmatpush.bf16.msra.mxu0 %v458
      %480 = vmatpush.bf16.msra.mxu0 %v457
      %481 = vmatmul.bf16.gmra.mxu0 %v409
      %v482 = vpop.f32.mrf.mxu0
      %v483 = vadd.f32 0.0, %v482
      %v484 = vpop.f32.mrf.mxu0
      %v485 = vadd.f32 0.0, %v484
      %486 = vmatmul.bf16.gmra.mxu0 %v410
      %v487 = vpop.f32.mrf.mxu0
      %v488 = vadd.f32 0.0, %v487
      %v489 = vpop.f32.mrf.mxu0
      %v490 = vadd.f32 0.0, %v489
      %491 = vmatmul.bf16.gmra.mxu0 %v411
      %v492 = vpop.f32.mrf.mxu0
      %v493 = vadd.f32 0.0, %v492
      %v494 = vpop.f32.mrf.mxu0
      %v495 = vadd.f32 0.0, %v494
      %496 = vmatmul.bf16.gmra.mxu0 %v412
      %v497 = vpop.f32.mrf.mxu0
      %v498 = vadd.f32 0.0, %v497
      %v499 = vpop.f32.mrf.mxu0
      %v500 = vadd.f32 0.0, %v499
      %501 = vmatmul.bf16.gmra.mxu0 %v413
      %v502 = vpop.f32.mrf.mxu0
      %v503 = vadd.f32 0.0, %v502
      %v504 = vpop.f32.mrf.mxu0
      %v505 = vadd.f32 0.0, %v504
      %506 = vmatmul.bf16.gmra.mxu0 %v414
      %v507 = vpop.f32.mrf.mxu0
      %v508 = vadd.f32 0.0, %v507
      %v509 = vpop.f32.mrf.mxu0
      %v510 = vadd.f32 0.0, %v509
      %511 = vmatmul.bf16.gmra.mxu0 %v415
      %v512 = vpop.f32.mrf.mxu0
      %v513 = vadd.f32 0.0, %v512
      %v514 = vpop.f32.mrf.mxu0
      %v515 = vadd.f32 0.0, %v514
      %516 = vmatmul.bf16.gmra.mxu0 %v416
      %v517 = vpop.f32.mrf.mxu0
      %v518 = vadd.f32 0.0, %v517
      %v519 = vpop.f32.mrf.mxu0
      %v520 = vadd.f32 0.0, %v519
      %521 = vdwg.mxu0
      %v522 = vld [vmem:[%s2] sm:$0xff]
      %v524 = vsel %vm103, %v71, 0
      %v527 = vsel %vm103, %v72, 0
      %v530 = vsel %vm103, %v73, 0
      %v533 = vsel %vm103, %v74, 0
      %v536 = vsel %vm103, %v75, 0
      %v539 = vsel %vm103, %v76, 0
      %v542 = vsel %vm103, %v77, 0
      %v545 = vsel %vm103, %v78, 0
      %v548 = vsel %vm103, %v79, 0
      %v551 = vsel %vm103, %v80, 0
      %v554 = vsel %vm103, %v81, 0
      %v557 = vsel %vm103, %v82, 0
      %v560 = vsel %vm103, %v83, 0
      %v563 = vsel %vm103, %v84, 0
      %v566 = vsel %vm103, %v85, 0
      %v569 = vsel %vm103, %v86, 0
      %v572 = vsel %vm103, %v87, 0
      %v575 = vsel %vm103, %v88, 0
      %v578 = vsel %vm103, %v89, 0
      %v581 = vsel %vm103, %v90, 0
      %v584 = vsel %vm103, %v91, 0
      %v587 = vsel %vm103, %v92, 0
      %v590 = vsel %vm103, %v93, 0
      %v593 = vsel %vm103, %v94, 0
      %v596 = vsel %vm103, %v95, 0
      %v599 = vsel %vm103, %v96, 0
      %v602 = vsel %vm103, %v97, 0
      %v605 = vsel %vm103, %v98, 0
      %v608 = vsel %vm103, %v99, 0
      %v611 = vsel %vm103, %v100, 0
      %v614 = vsel %vm103, %v101, 0
      %v617 = vsel %vm103, %v102, 0
      %619 = vmatpush.msra.mxu0 0.0
      %620 = vmatpush.msra.mxu0 0.0
      %621 = vmatpush.msra.mxu0 0.0
      %622 = vmatpush.msra.mxu0 0.0
      %623 = vmatpush.msra.mxu0 0.0
      %624 = vmatpush.msra.mxu0 0.0
      %625 = vmatpush.msra.mxu0 0.0
      %626 = vmatpush.msra.mxu0 0.0
      %627 = vmatpush.msra.mxu0 0.0
      %628 = vmatpush.msra.mxu0 0.0
      %629 = vmatpush.msra.mxu0 0.0
      %630 = vmatpush.msra.mxu0 0.0
      %631 = vmatpush.msra.mxu0 0.0
      %632 = vmatpush.msra.mxu0 0.0
      %633 = vmatpush.msra.mxu0 0.0
      %634 = vmatpush.msra.mxu0 %v522
      %635 = vmatmul.f32.gmra.mxu0 %v524
      %v636 = vpop.f32.mrf.mxu0
      %v637 = vadd.f32 0.0, %v636
      %638 = vmatmul.f32.gmra.mxu0 %v527
      %v639 = vpop.f32.mrf.mxu0
      %v640 = vadd.f32 0.0, %v639
      %641 = vmatmul.f32.gmra.mxu0 %v530
      %v642 = vpop.f32.mrf.mxu0
      %v643 = vadd.f32 0.0, %v642
      %644 = vmatmul.f32.gmra.mxu0 %v533
      %v645 = vpop.f32.mrf.mxu0
      %v646 = vadd.f32 0.0, %v645
      %647 = vmatmul.f32.gmra.mxu0 %v536
      %v648 = vpop.f32.mrf.mxu0
      %v649 = vadd.f32 0.0, %v648
      %650 = vmatmul.f32.gmra.mxu0 %v539
      %v651 = vpop.f32.mrf.mxu0
      %v652 = vadd.f32 0.0, %v651
      %653 = vmatmul.f32.gmra.mxu0 %v542
      %v654 = vpop.f32.mrf.mxu0
      %v655 = vadd.f32 0.0, %v654
      %656 = vmatmul.f32.gmra.mxu0 %v545
      %v657 = vpop.f32.mrf.mxu0
      %v658 = vadd.f32 0.0, %v657
      %659 = vmatmul.f32.gmra.mxu0 %v548
      %v660 = vpop.f32.mrf.mxu0
      %v661 = vadd.f32 0.0, %v660
      %662 = vmatmul.f32.gmra.mxu0 %v551
      %v663 = vpop.f32.mrf.mxu0
      %v664 = vadd.f32 0.0, %v663
      %665 = vmatmul.f32.gmra.mxu0 %v554
      %v666 = vpop.f32.mrf.mxu0
      %v667 = vadd.f32 0.0, %v666
      %668 = vmatmul.f32.gmra.mxu0 %v557
      %v669 = vpop.f32.mrf.mxu0
      %v670 = vadd.f32 0.0, %v669
      %671 = vmatmul.f32.gmra.mxu0 %v560
      %v672 = vpop.f32.mrf.mxu0
      %v673 = vadd.f32 0.0, %v672
      %674 = vmatmul.f32.gmra.mxu0 %v563
      %v675 = vpop.f32.mrf.mxu0
      %v676 = vadd.f32 0.0, %v675
      %677 = vmatmul.f32.gmra.mxu0 %v566
      %v678 = vpop.f32.mrf.mxu0
      %v679 = vadd.f32 0.0, %v678
      %680 = vmatmul.f32.gmra.mxu0 %v569
      %v681 = vpop.f32.mrf.mxu0
      %v682 = vadd.f32 0.0, %v681
      %683 = vmatmul.f32.gmra.mxu0 %v572
      %v684 = vpop.f32.mrf.mxu0
      %v685 = vadd.f32 0.0, %v684
      %686 = vmatmul.f32.gmra.mxu0 %v575
      %v687 = vpop.f32.mrf.mxu0
      %v688 = vadd.f32 0.0, %v687
      %689 = vmatmul.f32.gmra.mxu0 %v578
      %v690 = vpop.f32.mrf.mxu0
      %v691 = vadd.f32 0.0, %v690
      %692 = vmatmul.f32.gmra.mxu0 %v581
      %v693 = vpop.f32.mrf.mxu0
      %v694 = vadd.f32 0.0, %v693
      %695 = vmatmul.f32.gmra.mxu0 %v584
      %v696 = vpop.f32.mrf.mxu0
      %v697 = vadd.f32 0.0, %v696
      %698 = vmatmul.f32.gmra.mxu0 %v587
      %v699 = vpop.f32.mrf.mxu0
      %v700 = vadd.f32 0.0, %v699
      %701 = vmatmul.f32.gmra.mxu0 %v590
      %v702 = vpop.f32.mrf.mxu0
      %v703 = vadd.f32 0.0, %v702
      %704 = vmatmul.f32.gmra.mxu0 %v593
      %v705 = vpop.f32.mrf.mxu0
      %v706 = vadd.f32 0.0, %v705
      %707 = vmatmul.f32.gmra.mxu0 %v596
      %v708 = vpop.f32.mrf.mxu0
      %v709 = vadd.f32 0.0, %v708
      %710 = vmatmul.f32.gmra.mxu0 %v599
      %v711 = vpop.f32.mrf.mxu0
      %v712 = vadd.f32 0.0, %v711
      %713 = vmatmul.f32.gmra.mxu0 %v602
      %v714 = vpop.f32.mrf.mxu0
      %v715 = vadd.f32 0.0, %v714
      %716 = vmatmul.f32.gmra.mxu0 %v605
      %v717 = vpop.f32.mrf.mxu0
      %v718 = vadd.f32 0.0, %v717
      %719 = vmatmul.f32.gmra.mxu0 %v608
      %v720 = vpop.f32.mrf.mxu0
      %v721 = vadd.f32 0.0, %v720
      %722 = vmatmul.f32.gmra.mxu0 %v611
      %v723 = vpop.f32.mrf.mxu0
      %v724 = vadd.f32 0.0, %v723
      %725 = vmatmul.f32.gmra.mxu0 %v614
      %v726 = vpop.f32.mrf.mxu0
      %v727 = vadd.f32 0.0, %v726
      %728 = vmatmul.f32.gmra.mxu0 %v617
      %v729 = vpop.f32.mrf.mxu0
      %v730 = vadd.f32 0.0, %v729
      %731 = vdwg.mxu0
      %733 = vset.pattern.permute.xlu0 0
      %734 = vperm.xlu0 %733, %v338
      %v735 = vpop.permute.xlu0 %734
      %738 = vset.pattern.permute.xlu0 0
      %739 = vperm.xlu0 %738, %v340
      %v740 = vpop.permute.xlu0 %739
      %743 = vset.pattern.permute.xlu0 0
      %744 = vperm.xlu0 %743, %v343
      %v745 = vpop.permute.xlu0 %744
      %748 = vset.pattern.permute.xlu0 0
      %749 = vperm.xlu0 %748, %v345
      %v750 = vpop.permute.xlu0 %749
      %753 = vset.pattern.permute.xlu0 0
      %754 = vperm.xlu0 %753, %v348
      %v755 = vpop.permute.xlu0 %754
      %758 = vset.pattern.permute.xlu0 0
      %759 = vperm.xlu0 %758, %v350
      %v760 = vpop.permute.xlu0 %759
      %763 = vset.pattern.permute.xlu0 0
      %764 = vperm.xlu0 %763, %v353
      %v765 = vpop.permute.xlu0 %764
      %768 = vset.pattern.permute.xlu0 0
      %769 = vperm.xlu0 %768, %v355
      %v770 = vpop.permute.xlu0 %769
      %773 = vset.pattern.permute.xlu0 0
      %774 = vperm.xlu0 %773, %v358
      %v775 = vpop.permute.xlu0 %774
      %778 = vset.pattern.permute.xlu0 0
      %779 = vperm.xlu0 %778, %v360
      %v780 = vpop.permute.xlu0 %779
      %783 = vset.pattern.permute.xlu0 0
      %784 = vperm.xlu0 %783, %v363
      %v785 = vpop.permute.xlu0 %784
      %788 = vset.pattern.permute.xlu0 0
      %789 = vperm.xlu0 %788, %v365
      %v790 = vpop.permute.xlu0 %789
      %793 = vset.pattern.permute.xlu0 0
      %794 = vperm.xlu0 %793, %v368
      %v795 = vpop.permute.xlu0 %794
      %798 = vset.pattern.permute.xlu0 0
      %799 = vperm.xlu0 %798, %v370
      %v800 = vpop.permute.xlu0 %799
      %803 = vset.pattern.permute.xlu0 0
      %804 = vperm.xlu0 %803, %v373
      %v805 = vpop.permute.xlu0 %804
      %808 = vset.pattern.permute.xlu0 0
      %809 = vperm.xlu0 %808, %v375
      %v810 = vpop.permute.xlu0 %809
      %813 = vset.pattern.permute.xlu0 0
      %814 = vperm.xlu0 %813, %v483
      %v815 = vpop.permute.xlu0 %814
      %818 = vset.pattern.permute.xlu0 0
      %819 = vperm.xlu0 %818, %v485
      %v820 = vpop.permute.xlu0 %819
      %823 = vset.pattern.permute.xlu0 0
      %824 = vperm.xlu0 %823, %v488
      %v825 = vpop.permute.xlu0 %824
      %828 = vset.pattern.permute.xlu0 0
      %829 = vperm.xlu0 %828, %v490
      %v830 = vpop.permute.xlu0 %829
      %833 = vset.pattern.permute.xlu0 0
      %834 = vperm.xlu0 %833, %v493
      %v835 = vpop.permute.xlu0 %834
      %838 = vset.pattern.permute.xlu0 0
      %839 = vperm.xlu0 %838, %v495
      %v840 = vpop.permute.xlu0 %839
      %843 = vset.pattern.permute.xlu0 0
      %844 = vperm.xlu0 %843, %v498
      %v845 = vpop.permute.xlu0 %844
      %848 = vset.pattern.permute.xlu0 0
      %849 = vperm.xlu0 %848, %v500
      %v850 = vpop.permute.xlu0 %849
      %853 = vset.pattern.permute.xlu0 0
      %854 = vperm.xlu0 %853, %v503
      %v855 = vpop.permute.xlu0 %854
      %858 = vset.pattern.permute.xlu0 0
      %859 = vperm.xlu0 %858, %v505
      %v860 = vpop.permute.xlu0 %859
      %863 = vset.pattern.permute.xlu0 0
      %864 = vperm.xlu0 %863, %v508
      %v865 = vpop.permute.xlu0 %864
      %868 = vset.pattern.permute.xlu0 0
      %869 = vperm.xlu0 %868, %v510
      %v870 = vpop.permute.xlu0 %869
      %873 = vset.pattern.permute.xlu0 0
      %874 = vperm.xlu0 %873, %v513
      %v875 = vpop.permute.xlu0 %874
      %878 = vset.pattern.permute.xlu0 0
      %879 = vperm.xlu0 %878, %v515
      %v880 = vpop.permute.xlu0 %879
      %883 = vset.pattern.permute.xlu0 0
      %884 = vperm.xlu0 %883, %v518
      %v885 = vpop.permute.xlu0 %884
      %888 = vset.pattern.permute.xlu0 0
      %889 = vperm.xlu0 %888, %v520
      %v890 = vpop.permute.xlu0 %889
      %v892 = vadd.f32 %v735, %v637
      %v893 = vadd.f32 %v740, %v640
      %v894 = vadd.f32 %v745, %v643
      %v895 = vadd.f32 %v750, %v646
      %v896 = vadd.f32 %v755, %v649
      %v897 = vadd.f32 %v760, %v652
      %v898 = vadd.f32 %v765, %v655
      %v899 = vadd.f32 %v770, %v658
      %v900 = vadd.f32 %v775, %v661
      %v901 = vadd.f32 %v780, %v664
      %v902 = vadd.f32 %v785, %v667
      %v903 = vadd.f32 %v790, %v670
      %v904 = vadd.f32 %v795, %v673
      %v905 = vadd.f32 %v800, %v676
      %v906 = vadd.f32 %v805, %v679
      %v907 = vadd.f32 %v810, %v682
      %v908 = vadd.f32 %v815, %v685
      %v909 = vadd.f32 %v820, %v688
      %v910 = vadd.f32 %v825, %v691
      %v911 = vadd.f32 %v830, %v694
      %v912 = vadd.f32 %v835, %v697
      %v913 = vadd.f32 %v840, %v700
      %v914 = vadd.f32 %v845, %v703
      %v915 = vadd.f32 %v850, %v706
      %v916 = vadd.f32 %v855, %v709
      %v917 = vadd.f32 %v860, %v712
      %v918 = vadd.f32 %v865, %v715
      %v919 = vadd.f32 %v870, %v718
      %v920 = vadd.f32 %v875, %v721
      %v921 = vadd.f32 %v880, %v724
      %v922 = vadd.f32 %v885, %v727
      %v923 = vadd.f32 %v890, %v730
      %v924 = vld [vmem:[%s3] sm:$0x1]
      %v926 = vperm.slane %v924, 0
      %v928 = vadd.f32 %v892, %v926
      %v929 = vadd.f32 %v893, %v926
      %v930 = vadd.f32 %v894, %v926
      %v931 = vadd.f32 %v895, %v926
      %v932 = vadd.f32 %v896, %v926
      %v933 = vadd.f32 %v897, %v926
      %v934 = vadd.f32 %v898, %v926
      %v935 = vadd.f32 %v899, %v926
      %v936 = vadd.f32 %v900, %v926
      %v937 = vadd.f32 %v901, %v926
      %v938 = vadd.f32 %v902, %v926
      %v939 = vadd.f32 %v903, %v926
      %v940 = vadd.f32 %v904, %v926
      %v941 = vadd.f32 %v905, %v926
      %v942 = vadd.f32 %v906, %v926
      %v943 = vadd.f32 %v907, %v926
      %v944 = vadd.f32 %v908, %v926
      %v945 = vadd.f32 %v909, %v926
      %v946 = vadd.f32 %v910, %v926
      %v947 = vadd.f32 %v911, %v926
      %v948 = vadd.f32 %v912, %v926
      %v949 = vadd.f32 %v913, %v926
      %v950 = vadd.f32 %v914, %v926
      %v951 = vadd.f32 %v915, %v926
      %v952 = vadd.f32 %v916, %v926
      %v953 = vadd.f32 %v917, %v926
      %v954 = vadd.f32 %v918, %v926
      %v955 = vadd.f32 %v919, %v926
      %v956 = vadd.f32 %v920, %v926
      %v957 = vadd.f32 %v921, %v926
      %v958 = vadd.f32 %v922, %v926
      %v959 = vadd.f32 %v923, %v926
      %v960 = vmax.f32 %v928, 0.0
      %v961 = vmax.f32 %v929, 0.0
      %v962 = vmax.f32 %v930, 0.0
      %v963 = vmax.f32 %v931, 0.0
      %v964 = vmax.f32 %v932, 0.0
      %v965 = vmax.f32 %v933, 0.0
      %v966 = vmax.f32 %v934, 0.0
      %v967 = vmax.f32 %v935, 0.0
      %v968 = vmax.f32 %v936, 0.0
      %v969 = vmax.f32 %v937, 0.0
      %v970 = vmax.f32 %v938, 0.0
      %v971 = vmax.f32 %v939, 0.0
      %v972 = vmax.f32 %v940, 0.0
      %v973 = vmax.f32 %v941, 0.0
      %v974 = vmax.f32 %v942, 0.0
      %v975 = vmax.f32 %v943, 0.0
      %v976 = vmax.f32 %v944, 0.0
      %v977 = vmax.f32 %v945, 0.0
      %v978 = vmax.f32 %v946, 0.0
      %v979 = vmax.f32 %v947, 0.0
      %v980 = vmax.f32 %v948, 0.0
      %v981 = vmax.f32 %v949, 0.0
      %v982 = vmax.f32 %v950, 0.0
      %v983 = vmax.f32 %v951, 0.0
      %v984 = vmax.f32 %v952, 0.0
      %v985 = vmax.f32 %v953, 0.0
      %v986 = vmax.f32 %v954, 0.0
      %v987 = vmax.f32 %v955, 0.0
      %v988 = vmax.f32 %v956, 0.0
      %v989 = vmax.f32 %v957, 0.0
      %v990 = vmax.f32 %v958, 0.0
      %v991 = vmax.f32 %v959, 0.0
      %vm992 = vcmask 130048
      %v993 = vsel %vm992, %v960, 0.0
      %994 = vadd.xlane.f32.xlu0 %v993
      %v995 = vpop.xlane.xlu0 %994
      %v996 = vsel %vm992, %v961, 0.0
      %997 = vadd.xlane.f32.xlu0 %v996
      %v998 = vpop.xlane.xlu0 %997
      %v999 = vsel %vm992, %v962, 0.0
      %1000 = vadd.xlane.f32.xlu0 %v999
      %v1001 = vpop.xlane.xlu0 %1000
      %v1002 = vsel %vm992, %v963, 0.0
      %1003 = vadd.xlane.f32.xlu0 %v1002
      %v1004 = vpop.xlane.xlu0 %1003
      %v1005 = vsel %vm992, %v964, 0.0
      %1006 = vadd.xlane.f32.xlu0 %v1005
      %v1007 = vpop.xlane.xlu0 %1006
      %v1008 = vsel %vm992, %v965, 0.0
      %1009 = vadd.xlane.f32.xlu0 %v1008
      %v1010 = vpop.xlane.xlu0 %1009
      %v1011 = vsel %vm992, %v966, 0.0
      %1012 = vadd.xlane.f32.xlu0 %v1011
      %v1013 = vpop.xlane.xlu0 %1012
      %v1014 = vsel %vm992, %v967, 0.0
      %1015 = vadd.xlane.f32.xlu0 %v1014
      %v1016 = vpop.xlane.xlu0 %1015
      %v1017 = vsel %vm992, %v968, 0.0
      %1018 = vadd.xlane.f32.xlu0 %v1017
      %v1019 = vpop.xlane.xlu0 %1018
      %v1020 = vsel %vm992, %v969, 0.0
      %1021 = vadd.xlane.f32.xlu0 %v1020
      %v1022 = vpop.xlane.xlu0 %1021
      %v1023 = vsel %vm992, %v970, 0.0
      %1024 = vadd.xlane.f32.xlu0 %v1023
      %v1025 = vpop.xlane.xlu0 %1024
      %v1026 = vsel %vm992, %v971, 0.0
      %1027 = vadd.xlane.f32.xlu0 %v1026
      %v1028 = vpop.xlane.xlu0 %1027
      %v1029 = vsel %vm992, %v972, 0.0
      %1030 = vadd.xlane.f32.xlu0 %v1029
      %v1031 = vpop.xlane.xlu0 %1030
      %v1032 = vsel %vm992, %v973, 0.0
      %1033 = vadd.xlane.f32.xlu0 %v1032
      %v1034 = vpop.xlane.xlu0 %1033
      %v1035 = vsel %vm992, %v974, 0.0
      %1036 = vadd.xlane.f32.xlu0 %v1035
      %v1037 = vpop.xlane.xlu0 %1036
      %v1038 = vsel %vm992, %v975, 0.0
      %1039 = vadd.xlane.f32.xlu0 %v1038
      %v1040 = vpop.xlane.xlu0 %1039
      %v1041 = vsel %vm992, %v976, 0.0
      %1042 = vadd.xlane.f32.xlu0 %v1041
      %v1043 = vpop.xlane.xlu0 %1042
      %v1044 = vsel %vm992, %v977, 0.0
      %1045 = vadd.xlane.f32.xlu0 %v1044
      %v1046 = vpop.xlane.xlu0 %1045
      %v1047 = vsel %vm992, %v978, 0.0
      %1048 = vadd.xlane.f32.xlu0 %v1047
      %v1049 = vpop.xlane.xlu0 %1048
      %v1050 = vsel %vm992, %v979, 0.0
      %1051 = vadd.xlane.f32.xlu0 %v1050
      %v1052 = vpop.xlane.xlu0 %1051
      %v1053 = vsel %vm992, %v980, 0.0
      %1054 = vadd.xlane.f32.xlu0 %v1053
      %v1055 = vpop.xlane.xlu0 %1054
      %v1056 = vsel %vm992, %v981, 0.0
      %1057 = vadd.xlane.f32.xlu0 %v1056
      %v1058 = vpop.xlane.xlu0 %1057
      %v1059 = vsel %vm992, %v982, 0.0
      %1060 = vadd.xlane.f32.xlu0 %v1059
      %v1061 = vpop.xlane.xlu0 %1060
      %v1062 = vsel %vm992, %v983, 0.0
      %1063 = vadd.xlane.f32.xlu0 %v1062
      %v1064 = vpop.xlane.xlu0 %1063
      %v1065 = vsel %vm992, %v984, 0.0
      %1066 = vadd.xlane.f32.xlu0 %v1065
      %v1067 = vpop.xlane.xlu0 %1066
      %v1068 = vsel %vm992, %v985, 0.0
      %1069 = vadd.xlane.f32.xlu0 %v1068
      %v1070 = vpop.xlane.xlu0 %1069
      %v1071 = vsel %vm992, %v986, 0.0
      %1072 = vadd.xlane.f32.xlu0 %v1071
      %v1073 = vpop.xlane.xlu0 %1072
      %v1074 = vsel %vm992, %v987, 0.0
      %1075 = vadd.xlane.f32.xlu0 %v1074
      %v1076 = vpop.xlane.xlu0 %1075
      %v1077 = vsel %vm992, %v988, 0.0
      %1078 = vadd.xlane.f32.xlu0 %v1077
      %v1079 = vpop.xlane.xlu0 %1078
      %v1080 = vsel %vm992, %v989, 0.0
      %1081 = vadd.xlane.f32.xlu0 %v1080
      %v1082 = vpop.xlane.xlu0 %1081
      %v1083 = vsel %vm992, %v990, 0.0
      %1084 = vadd.xlane.f32.xlu0 %v1083
      %v1085 = vpop.xlane.xlu0 %1084
      %v1086 = vsel %vm992, %v991, 0.0
      %1087 = vadd.xlane.f32.xlu0 %v1086
      %v1088 = vpop.xlane.xlu0 %1087
      %v1089 = vpack.c.bf16 %v995, %v995
      %v1090 = vpack.c.bf16 %v998, %v998
      %v1091 = vpack.c.bf16 %v1001, %v1001
      %v1092 = vpack.c.bf16 %v1004, %v1004
      %v1093 = vpack.c.bf16 %v1007, %v1007
      %v1094 = vpack.c.bf16 %v1010, %v1010
      %v1095 = vpack.c.bf16 %v1013, %v1013
      %v1096 = vpack.c.bf16 %v1016, %v1016
      %v1097 = vpack.c.bf16 %v1019, %v1019
      %v1098 = vpack.c.bf16 %v1022, %v1022
      %v1099 = vpack.c.bf16 %v1025, %v1025
      %v1100 = vpack.c.bf16 %v1028, %v1028
      %v1101 = vpack.c.bf16 %v1031, %v1031
      %v1102 = vpack.c.bf16 %v1034, %v1034
      %v1103 = vpack.c.bf16 %v1037, %v1037
      %v1104 = vpack.c.bf16 %v1040, %v1040
      %v1105 = vpack.c.bf16 %v1043, %v1043
      %v1106 = vpack.c.bf16 %v1046, %v1046
      %v1107 = vpack.c.bf16 %v1049, %v1049
      %v1108 = vpack.c.bf16 %v1052, %v1052
      %v1109 = vpack.c.bf16 %v1055, %v1055
      %v1110 = vpack.c.bf16 %v1058, %v1058
      %v1111 = vpack.c.bf16 %v1061, %v1061
      %v1112 = vpack.c.bf16 %v1064, %v1064
      %v1113 = vpack.c.bf16 %v1067, %v1067
      %v1114 = vpack.c.bf16 %v1070, %v1070
      %v1115 = vpack.c.bf16 %v1073, %v1073
      %v1116 = vpack.c.bf16 %v1076, %v1076
      %v1117 = vpack.c.bf16 %v1079, %v1079
      %v1118 = vpack.c.bf16 %v1082, %v1082
      %v1119 = vpack.c.bf16 %v1085, %v1085
      %v1120 = vpack.c.bf16 %v1088, %v1088
      %v1137 = vunpack.c.l.b16 %v1089
      %v1138 = vunpack.c.l.b16 %v1090
      %v1139 = vunpack.c.l.b16 %v1091
      %v1140 = vunpack.c.l.b16 %v1092
      %v1141 = vunpack.c.l.b16 %v1093
      %v1142 = vunpack.c.l.b16 %v1094
      %v1143 = vunpack.c.l.b16 %v1095
      %v1144 = vunpack.c.l.b16 %v1096
      %v1145 = vunpack.c.l.b16 %v1097
      %v1146 = vunpack.c.l.b16 %v1098
      %v1147 = vunpack.c.l.b16 %v1099
      %v1148 = vunpack.c.l.b16 %v1100
      %v1149 = vunpack.c.l.b16 %v1101
      %v1150 = vunpack.c.l.b16 %v1102
      %v1151 = vunpack.c.l.b16 %v1103
      %v1152 = vunpack.c.l.b16 %v1104
      %v1153 = vpack.c.b16 %v1138, %v1137
      %v1154 = vpack.c.b16 %v1140, %v1139
      %v1155 = vpack.c.b16 %v1142, %v1141
      %v1156 = vpack.c.b16 %v1144, %v1143
      %v1157 = vpack.c.b16 %v1146, %v1145
      %v1158 = vpack.c.b16 %v1148, %v1147
      %v1159 = vpack.c.b16 %v1150, %v1149
      %v1160 = vpack.c.b16 %v1152, %v1151
      %1169 = vmatpush.bf16.msra.mxu0 %v1160
      %1170 = vmatpush.bf16.msra.mxu0 %v1159
      %1171 = vmatpush.bf16.msra.mxu0 %v1158
      %1172 = vmatpush.bf16.msra.mxu0 %v1157
      %1173 = vmatpush.bf16.msra.mxu0 %v1156
      %1174 = vmatpush.bf16.msra.mxu0 %v1155
      %1175 = vmatpush.bf16.msra.mxu0 %v1154
      %1176 = vmatpush.bf16.msra.mxu0 %v1153
      %1177 = vmatmul.bf16.gmra.mxu0 %v264
      %v1178 = vpop.f32.mrf.mxu0
      %v1179 = vadd.f32 0.0, %v1178
      %v1180 = vpop.f32.mrf.mxu0
      %v1181 = vadd.f32 0.0, %v1180
      %1182 = vmatmul.bf16.gmra.mxu0 %v265
      %v1183 = vpop.f32.mrf.mxu0
      %v1184 = vadd.f32 0.0, %v1183
      %v1185 = vpop.f32.mrf.mxu0
      %v1186 = vadd.f32 0.0, %v1185
      %1187 = vmatmul.bf16.gmra.mxu0 %v266
      %v1188 = vpop.f32.mrf.mxu0
      %v1189 = vadd.f32 0.0, %v1188
      %v1190 = vpop.f32.mrf.mxu0
      %v1191 = vadd.f32 0.0, %v1190
      %1192 = vmatmul.bf16.gmra.mxu0 %v267
      %v1193 = vpop.f32.mrf.mxu0
      %v1194 = vadd.f32 0.0, %v1193
      %v1195 = vpop.f32.mrf.mxu0
      %v1196 = vadd.f32 0.0, %v1195
      %1197 = vmatmul.bf16.gmra.mxu0 %v268
      %v1198 = vpop.f32.mrf.mxu0
      %v1199 = vadd.f32 0.0, %v1198
      %v1200 = vpop.f32.mrf.mxu0
      %v1201 = vadd.f32 0.0, %v1200
      %1202 = vmatmul.bf16.gmra.mxu0 %v269
      %v1203 = vpop.f32.mrf.mxu0
      %v1204 = vadd.f32 0.0, %v1203
      %v1205 = vpop.f32.mrf.mxu0
      %v1206 = vadd.f32 0.0, %v1205
      %1207 = vmatmul.bf16.gmra.mxu0 %v270
      %v1208 = vpop.f32.mrf.mxu0
      %v1209 = vadd.f32 0.0, %v1208
      %v1210 = vpop.f32.mrf.mxu0
      %v1211 = vadd.f32 0.0, %v1210
      %1212 = vmatmul.bf16.gmra.mxu0 %v271
      %v1213 = vpop.f32.mrf.mxu0
      %v1214 = vadd.f32 0.0, %v1213
      %v1215 = vpop.f32.mrf.mxu0
      %v1216 = vadd.f32 0.0, %v1215
      %1217 = vdwg.mxu0
      %v1234 = vunpack.c.l.b16 %v1105
      %v1235 = vunpack.c.l.b16 %v1106
      %v1236 = vunpack.c.l.b16 %v1107
      %v1237 = vunpack.c.l.b16 %v1108
      %v1238 = vunpack.c.l.b16 %v1109
      %v1239 = vunpack.c.l.b16 %v1110
      %v1240 = vunpack.c.l.b16 %v1111
      %v1241 = vunpack.c.l.b16 %v1112
      %v1242 = vunpack.c.l.b16 %v1113
      %v1243 = vunpack.c.l.b16 %v1114
      %v1244 = vunpack.c.l.b16 %v1115
      %v1245 = vunpack.c.l.b16 %v1116
      %v1246 = vunpack.c.l.b16 %v1117
      %v1247 = vunpack.c.l.b16 %v1118
      %v1248 = vunpack.c.l.b16 %v1119
      %v1249 = vunpack.c.l.b16 %v1120
      %v1250 = vpack.c.b16 %v1235, %v1234
      %v1251 = vpack.c.b16 %v1237, %v1236
      %v1252 = vpack.c.b16 %v1239, %v1238
      %v1253 = vpack.c.b16 %v1241, %v1240
      %v1254 = vpack.c.b16 %v1243, %v1242
      %v1255 = vpack.c.b16 %v1245, %v1244
      %v1256 = vpack.c.b16 %v1247, %v1246
      %v1257 = vpack.c.b16 %v1249, %v1248
      %1266 = vmatpush.bf16.msra.mxu0 %v1257
      %1267 = vmatpush.bf16.msra.mxu0 %v1256
      %1268 = vmatpush.bf16.msra.mxu0 %v1255
      %1269 = vmatpush.bf16.msra.mxu0 %v1254
      %1270 = vmatpush.bf16.msra.mxu0 %v1253
      %1271 = vmatpush.bf16.msra.mxu0 %v1252
      %1272 = vmatpush.bf16.msra.mxu0 %v1251
      %1273 = vmatpush.bf16.msra.mxu0 %v1250
      %1274 = vmatmul.bf16.gmra.mxu0 %v409
      %v1275 = vpop.f32.mrf.mxu0
      %v1276 = vadd.f32 0.0, %v1275
      %v1277 = vpop.f32.mrf.mxu0
      %v1278 = vadd.f32 0.0, %v1277
      %1279 = vmatmul.bf16.gmra.mxu0 %v410
      %v1280 = vpop.f32.mrf.mxu0
      %v1281 = vadd.f32 0.0, %v1280
      %v1282 = vpop.f32.mrf.mxu0
      %v1283 = vadd.f32 0.0, %v1282
      %1284 = vmatmul.bf16.gmra.mxu0 %v411
      %v1285 = vpop.f32.mrf.mxu0
      %v1286 = vadd.f32 0.0, %v1285
      %v1287 = vpop.f32.mrf.mxu0
      %v1288 = vadd.f32 0.0, %v1287
      %1289 = vmatmul.bf16.gmra.mxu0 %v412
      %v1290 = vpop.f32.mrf.mxu0
      %v1291 = vadd.f32 0.0, %v1290
      %v1292 = vpop.f32.mrf.mxu0
      %v1293 = vadd.f32 0.0, %v1292
      %1294 = vmatmul.bf16.gmra.mxu0 %v413
      %v1295 = vpop.f32.mrf.mxu0
      %v1296 = vadd.f32 0.0, %v1295
      %v1297 = vpop.f32.mrf.mxu0
      %v1298 = vadd.f32 0.0, %v1297
      %1299 = vmatmul.bf16.gmra.mxu0 %v414
      %v1300 = vpop.f32.mrf.mxu0
      %v1301 = vadd.f32 0.0, %v1300
      %v1302 = vpop.f32.mrf.mxu0
      %v1303 = vadd.f32 0.0, %v1302
      %1304 = vmatmul.bf16.gmra.mxu0 %v415
      %v1305 = vpop.f32.mrf.mxu0
      %v1306 = vadd.f32 0.0, %v1305
      %v1307 = vpop.f32.mrf.mxu0
      %v1308 = vadd.f32 0.0, %v1307
      %1309 = vmatmul.bf16.gmra.mxu0 %v416
      %v1310 = vpop.f32.mrf.mxu0
      %v1311 = vadd.f32 0.0, %v1310
      %v1312 = vpop.f32.mrf.mxu0
      %v1313 = vadd.f32 0.0, %v1312
      %1314 = vdwg.mxu0
      %v1315 = vld [vmem:[%s4] sm:$0xff]
      %v1316 = vld [vmem:[%s4 + $0x8] sm:$0xff]
      %v1318 = vsel %vm992, %v960, 0
      %v1321 = vsel %vm992, %v961, 0
      %v1324 = vsel %vm992, %v962, 0
      %v1327 = vsel %vm992, %v963, 0
      %v1330 = vsel %vm992, %v964, 0
      %v1333 = vsel %vm992, %v965, 0
      %v1336 = vsel %vm992, %v966, 0
      %v1339 = vsel %vm992, %v967, 0
      %v1342 = vsel %vm992, %v968, 0
      %v1345 = vsel %vm992, %v969, 0
      %v1348 = vsel %vm992, %v970, 0
      %v1351 = vsel %vm992, %v971, 0
      %v1354 = vsel %vm992, %v972, 0
      %v1357 = vsel %vm992, %v973, 0
      %v1360 = vsel %vm992, %v974, 0
      %v1363 = vsel %vm992, %v975, 0
      %v1366 = vsel %vm992, %v976, 0
      %v1369 = vsel %vm992, %v977, 0
      %v1372 = vsel %vm992, %v978, 0
      %v1375 = vsel %vm992, %v979, 0
      %v1378 = vsel %vm992, %v980, 0
      %v1381 = vsel %vm992, %v981, 0
      %v1384 = vsel %vm992, %v982, 0
      %v1387 = vsel %vm992, %v983, 0
      %v1390 = vsel %vm992, %v984, 0
      %v1393 = vsel %vm992, %v985, 0
      %v1396 = vsel %vm992, %v986, 0
      %v1399 = vsel %vm992, %v987, 0
      %v1402 = vsel %vm992, %v988, 0
      %v1405 = vsel %vm992, %v989, 0
      %v1408 = vsel %vm992, %v990, 0
      %v1411 = vsel %vm992, %v991, 0
      %1413 = vmatpush.msra.mxu0 0.0
      %1414 = vmatpush.msra.mxu0 0.0
      %1415 = vmatpush.msra.mxu0 0.0
      %1416 = vmatpush.msra.mxu0 0.0
      %1417 = vmatpush.msra.mxu0 0.0
      %1418 = vmatpush.msra.mxu0 0.0
      %1419 = vmatpush.msra.mxu0 0.0
      %1420 = vmatpush.msra.mxu0 0.0
      %1421 = vmatpush.msra.mxu0 0.0
      %1422 = vmatpush.msra.mxu0 0.0
      %1423 = vmatpush.msra.mxu0 0.0
      %1424 = vmatpush.msra.mxu0 0.0
      %1425 = vmatpush.msra.mxu0 0.0
      %1426 = vmatpush.msra.mxu0 0.0
      %1427 = vmatpush.msra.mxu0 %v1316
      %1428 = vmatpush.msra.mxu0 %v1315
      %1429 = vmatmul.f32.gmra.mxu0 %v1318
      %v1430 = vpop.f32.mrf.mxu0
      %v1431 = vadd.f32 0.0, %v1430
      %1432 = vmatmul.f32.gmra.mxu0 %v1321
      %v1433 = vpop.f32.mrf.mxu0
      %v1434 = vadd.f32 0.0, %v1433
      %1435 = vmatmul.f32.gmra.mxu0 %v1324
      %v1436 = vpop.f32.mrf.mxu0
      %v1437 = vadd.f32 0.0, %v1436
      %1438 = vmatmul.f32.gmra.mxu0 %v1327
      %v1439 = vpop.f32.mrf.mxu0
      %v1440 = vadd.f32 0.0, %v1439
      %1441 = vmatmul.f32.gmra.mxu0 %v1330
      %v1442 = vpop.f32.mrf.mxu0
      %v1443 = vadd.f32 0.0, %v1442
      %1444 = vmatmul.f32.gmra.mxu0 %v1333
      %v1445 = vpop.f32.mrf.mxu0
      %v1446 = vadd.f32 0.0, %v1445
      %1447 = vmatmul.f32.gmra.mxu0 %v1336
      %v1448 = vpop.f32.mrf.mxu0
      %v1449 = vadd.f32 0.0, %v1448
      %1450 = vmatmul.f32.gmra.mxu0 %v1339
      %v1451 = vpop.f32.mrf.mxu0
      %v1452 = vadd.f32 0.0, %v1451
      %1453 = vmatmul.f32.gmra.mxu0 %v1342
      %v1454 = vpop.f32.mrf.mxu0
      %v1455 = vadd.f32 0.0, %v1454
      %1456 = vmatmul.f32.gmra.mxu0 %v1345
      %v1457 = vpop.f32.mrf.mxu0
      %v1458 = vadd.f32 0.0, %v1457
      %1459 = vmatmul.f32.gmra.mxu0 %v1348
      %v1460 = vpop.f32.mrf.mxu0
      %v1461 = vadd.f32 0.0, %v1460
      %1462 = vmatmul.f32.gmra.mxu0 %v1351
      %v1463 = vpop.f32.mrf.mxu0
      %v1464 = vadd.f32 0.0, %v1463
      %1465 = vmatmul.f32.gmra.mxu0 %v1354
      %v1466 = vpop.f32.mrf.mxu0
      %v1467 = vadd.f32 0.0, %v1466
      %1468 = vmatmul.f32.gmra.mxu0 %v1357
      %v1469 = vpop.f32.mrf.mxu0
      %v1470 = vadd.f32 0.0, %v1469
      %1471 = vmatmul.f32.gmra.mxu0 %v1360
      %v1472 = vpop.f32.mrf.mxu0
      %v1473 = vadd.f32 0.0, %v1472
      %1474 = vmatmul.f32.gmra.mxu0 %v1363
      %v1475 = vpop.f32.mrf.mxu0
      %v1476 = vadd.f32 0.0, %v1475
      %1477 = vmatmul.f32.gmra.mxu0 %v1366
      %v1478 = vpop.f32.mrf.mxu0
      %v1479 = vadd.f32 0.0, %v1478
      %1480 = vmatmul.f32.gmra.mxu0 %v1369
      %v1481 = vpop.f32.mrf.mxu0
      %v1482 = vadd.f32 0.0, %v1481
      %1483 = vmatmul.f32.gmra.mxu0 %v1372
      %v1484 = vpop.f32.mrf.mxu0
      %v1485 = vadd.f32 0.0, %v1484
      %1486 = vmatmul.f32.gmra.mxu0 %v1375
      %v1487 = vpop.f32.mrf.mxu0
      %v1488 = vadd.f32 0.0, %v1487
      %1489 = vmatmul.f32.gmra.mxu0 %v1378
      %v1490 = vpop.f32.mrf.mxu0
      %v1491 = vadd.f32 0.0, %v1490
      %1492 = vmatmul.f32.gmra.mxu0 %v1381
      %v1493 = vpop.f32.mrf.mxu0
      %v1494 = vadd.f32 0.0, %v1493
      %1495 = vmatmul.f32.gmra.mxu0 %v1384
      %v1496 = vpop.f32.mrf.mxu0
      %v1497 = vadd.f32 0.0, %v1496
      %1498 = vmatmul.f32.gmra.mxu0 %v1387
      %v1499 = vpop.f32.mrf.mxu0
      %v1500 = vadd.f32 0.0, %v1499
      %1501 = vmatmul.f32.gmra.mxu0 %v1390
      %v1502 = vpop.f32.mrf.mxu0
      %v1503 = vadd.f32 0.0, %v1502
      %1504 = vmatmul.f32.gmra.mxu0 %v1393
      %v1505 = vpop.f32.mrf.mxu0
      %v1506 = vadd.f32 0.0, %v1505
      %1507 = vmatmul.f32.gmra.mxu0 %v1396
      %v1508 = vpop.f32.mrf.mxu0
      %v1509 = vadd.f32 0.0, %v1508
      %1510 = vmatmul.f32.gmra.mxu0 %v1399
      %v1511 = vpop.f32.mrf.mxu0
      %v1512 = vadd.f32 0.0, %v1511
      %1513 = vmatmul.f32.gmra.mxu0 %v1402
      %v1514 = vpop.f32.mrf.mxu0
      %v1515 = vadd.f32 0.0, %v1514
      %1516 = vmatmul.f32.gmra.mxu0 %v1405
      %v1517 = vpop.f32.mrf.mxu0
      %v1518 = vadd.f32 0.0, %v1517
      %1519 = vmatmul.f32.gmra.mxu0 %v1408
      %v1520 = vpop.f32.mrf.mxu0
      %v1521 = vadd.f32 0.0, %v1520
      %1522 = vmatmul.f32.gmra.mxu0 %v1411
      %v1523 = vpop.f32.mrf.mxu0
      %v1524 = vadd.f32 0.0, %v1523
      %1525 = vdwg.mxu0
      %1527 = vset.pattern.permute.xlu0 0
      %1528 = vperm.xlu0 %1527, %v1179
      %v1529 = vpop.permute.xlu0 %1528
      %1532 = vset.pattern.permute.xlu0 0
      %1533 = vperm.xlu0 %1532, %v1181
      %v1534 = vpop.permute.xlu0 %1533
      %1537 = vset.pattern.permute.xlu0 0
      %1538 = vperm.xlu0 %1537, %v1184
      %v1539 = vpop.permute.xlu0 %1538
      %1542 = vset.pattern.permute.xlu0 0
      %1543 = vperm.xlu0 %1542, %v1186
      %v1544 = vpop.permute.xlu0 %1543
      %1547 = vset.pattern.permute.xlu0 0
      %1548 = vperm.xlu0 %1547, %v1189
      %v1549 = vpop.permute.xlu0 %1548
      %1552 = vset.pattern.permute.xlu0 0
      %1553 = vperm.xlu0 %1552, %v1191
      %v1554 = vpop.permute.xlu0 %1553
      %1557 = vset.pattern.permute.xlu0 0
      %1558 = vperm.xlu0 %1557, %v1194
      %v1559 = vpop.permute.xlu0 %1558
      %1562 = vset.pattern.permute.xlu0 0
      %1563 = vperm.xlu0 %1562, %v1196
      %v1564 = vpop.permute.xlu0 %1563
      %1567 = vset.pattern.permute.xlu0 0
      %1568 = vperm.xlu0 %1567, %v1199
      %v1569 = vpop.permute.xlu0 %1568
      %1572 = vset.pattern.permute.xlu0 0
      %1573 = vperm.xlu0 %1572, %v1201
      %v1574 = vpop.permute.xlu0 %1573
      %1577 = vset.pattern.permute.xlu0 0
      %1578 = vperm.xlu0 %1577, %v1204
      %v1579 = vpop.permute.xlu0 %1578
      %1582 = vset.pattern.permute.xlu0 0
      %1583 = vperm.xlu0 %1582, %v1206
      %v1584 = vpop.permute.xlu0 %1583
      %1587 = vset.pattern.permute.xlu0 0
      %1588 = vperm.xlu0 %1587, %v1209
      %v1589 = vpop.permute.xlu0 %1588
      %1592 = vset.pattern.permute.xlu0 0
      %1593 = vperm.xlu0 %1592, %v1211
      %v1594 = vpop.permute.xlu0 %1593
      %1597 = vset.pattern.permute.xlu0 0
      %1598 = vperm.xlu0 %1597, %v1214
      %v1599 = vpop.permute.xlu0 %1598
      %1602 = vset.pattern.permute.xlu0 0
      %1603 = vperm.xlu0 %1602, %v1216
      %v1604 = vpop.permute.xlu0 %1603
      %1607 = vset.pattern.permute.xlu0 0
      %1608 = vperm.xlu0 %1607, %v1276
      %v1609 = vpop.permute.xlu0 %1608
      %1612 = vset.pattern.permute.xlu0 0
      %1613 = vperm.xlu0 %1612, %v1278
      %v1614 = vpop.permute.xlu0 %1613
      %1617 = vset.pattern.permute.xlu0 0
      %1618 = vperm.xlu0 %1617, %v1281
      %v1619 = vpop.permute.xlu0 %1618
      %1622 = vset.pattern.permute.xlu0 0
      %1623 = vperm.xlu0 %1622, %v1283
      %v1624 = vpop.permute.xlu0 %1623
      %1627 = vset.pattern.permute.xlu0 0
      %1628 = vperm.xlu0 %1627, %v1286
      %v1629 = vpop.permute.xlu0 %1628
      %1632 = vset.pattern.permute.xlu0 0
      %1633 = vperm.xlu0 %1632, %v1288
      %v1634 = vpop.permute.xlu0 %1633
      %1637 = vset.pattern.permute.xlu0 0
      %1638 = vperm.xlu0 %1637, %v1291
      %v1639 = vpop.permute.xlu0 %1638
      %1642 = vset.pattern.permute.xlu0 0
      %1643 = vperm.xlu0 %1642, %v1293
      %v1644 = vpop.permute.xlu0 %1643
      %1647 = vset.pattern.permute.xlu0 0
      %1648 = vperm.xlu0 %1647, %v1296
      %v1649 = vpop.permute.xlu0 %1648
      %1652 = vset.pattern.permute.xlu0 0
      %1653 = vperm.xlu0 %1652, %v1298
      %v1654 = vpop.permute.xlu0 %1653
      %1657 = vset.pattern.permute.xlu0 0
      %1658 = vperm.xlu0 %1657, %v1301
      %v1659 = vpop.permute.xlu0 %1658
      %1662 = vset.pattern.permute.xlu0 0
      %1663 = vperm.xlu0 %1662, %v1303
      %v1664 = vpop.permute.xlu0 %1663
      %1667 = vset.pattern.permute.xlu0 0
      %1668 = vperm.xlu0 %1667, %v1306
      %v1669 = vpop.permute.xlu0 %1668
      %1672 = vset.pattern.permute.xlu0 0
      %1673 = vperm.xlu0 %1672, %v1308
      %v1674 = vpop.permute.xlu0 %1673
      %1677 = vset.pattern.permute.xlu0 0
      %1678 = vperm.xlu0 %1677, %v1311
      %v1679 = vpop.permute.xlu0 %1678
      %1682 = vset.pattern.permute.xlu0 0
      %1683 = vperm.xlu0 %1682, %v1313
      %v1684 = vpop.permute.xlu0 %1683
      %v1686 = vadd.f32 %v1529, %v1431
      %v1687 = vadd.f32 %v1534, %v1434
      %v1688 = vadd.f32 %v1539, %v1437
      %v1689 = vadd.f32 %v1544, %v1440
      %v1690 = vadd.f32 %v1549, %v1443
      %v1691 = vadd.f32 %v1554, %v1446
      %v1692 = vadd.f32 %v1559, %v1449
      %v1693 = vadd.f32 %v1564, %v1452
      %v1694 = vadd.f32 %v1569, %v1455
      %v1695 = vadd.f32 %v1574, %v1458
      %v1696 = vadd.f32 %v1579, %v1461
      %v1697 = vadd.f32 %v1584, %v1464
      %v1698 = vadd.f32 %v1589, %v1467
      %v1699 = vadd.f32 %v1594, %v1470
      %v1700 = vadd.f32 %v1599, %v1473
      %v1701 = vadd.f32 %v1604, %v1476
      %v1702 = vadd.f32 %v1609, %v1479
      %v1703 = vadd.f32 %v1614, %v1482
      %v1704 = vadd.f32 %v1619, %v1485
      %v1705 = vadd.f32 %v1624, %v1488
      %v1706 = vadd.f32 %v1629, %v1491
      %v1707 = vadd.f32 %v1634, %v1494
      %v1708 = vadd.f32 %v1639, %v1497
      %v1709 = vadd.f32 %v1644, %v1500
      %v1710 = vadd.f32 %v1649, %v1503
      %v1711 = vadd.f32 %v1654, %v1506
      %v1712 = vadd.f32 %v1659, %v1509
      %v1713 = vadd.f32 %v1664, %v1512
      %v1714 = vadd.f32 %v1669, %v1515
      %v1715 = vadd.f32 %v1674, %v1518
      %v1716 = vadd.f32 %v1679, %v1521
      %v1717 = vadd.f32 %v1684, %v1524
      %v1718 = vld [vmem:[%s5] sm:$0x1]
      %v1720 = vperm.slane %v1718, 0
      %v1722 = vadd.f32 %v1686, %v1720
      %v1723 = vadd.f32 %v1687, %v1720
      %v1724 = vadd.f32 %v1688, %v1720
      %v1725 = vadd.f32 %v1689, %v1720
      %v1726 = vadd.f32 %v1690, %v1720
      %v1727 = vadd.f32 %v1691, %v1720
      %v1728 = vadd.f32 %v1692, %v1720
      %v1729 = vadd.f32 %v1693, %v1720
      %v1730 = vadd.f32 %v1694, %v1720
      %v1731 = vadd.f32 %v1695, %v1720
      %v1732 = vadd.f32 %v1696, %v1720
      %v1733 = vadd.f32 %v1697, %v1720
      %v1734 = vadd.f32 %v1698, %v1720
      %v1735 = vadd.f32 %v1699, %v1720
      %v1736 = vadd.f32 %v1700, %v1720
      %v1737 = vadd.f32 %v1701, %v1720
      %v1738 = vadd.f32 %v1702, %v1720
      %v1739 = vadd.f32 %v1703, %v1720
      %v1740 = vadd.f32 %v1704, %v1720
      %v1741 = vadd.f32 %v1705, %v1720
      %v1742 = vadd.f32 %v1706, %v1720
      %v1743 = vadd.f32 %v1707, %v1720
      %v1744 = vadd.f32 %v1708, %v1720
      %v1745 = vadd.f32 %v1709, %v1720
      %v1746 = vadd.f32 %v1710, %v1720
      %v1747 = vadd.f32 %v1711, %v1720
      %v1748 = vadd.f32 %v1712, %v1720
      %v1749 = vadd.f32 %v1713, %v1720
      %v1750 = vadd.f32 %v1714, %v1720
      %v1751 = vadd.f32 %v1715, %v1720
      %v1752 = vadd.f32 %v1716, %v1720
      %v1753 = vadd.f32 %v1717, %v1720
      %v1754 = vmax.f32 %v1722, 0.0
      %v1755 = vmax.f32 %v1723, 0.0
      %v1756 = vmax.f32 %v1724, 0.0
      %v1757 = vmax.f32 %v1725, 0.0
      %v1758 = vmax.f32 %v1726, 0.0
      %v1759 = vmax.f32 %v1727, 0.0
      %v1760 = vmax.f32 %v1728, 0.0
      %v1761 = vmax.f32 %v1729, 0.0
      %v1762 = vmax.f32 %v1730, 0.0
      %v1763 = vmax.f32 %v1731, 0.0
      %v1764 = vmax.f32 %v1732, 0.0
      %v1765 = vmax.f32 %v1733, 0.0
      %v1766 = vmax.f32 %v1734, 0.0
      %v1767 = vmax.f32 %v1735, 0.0
      %v1768 = vmax.f32 %v1736, 0.0
      %v1769 = vmax.f32 %v1737, 0.0
      %v1770 = vmax.f32 %v1738, 0.0
      %v1771 = vmax.f32 %v1739, 0.0
      %v1772 = vmax.f32 %v1740, 0.0
      %v1773 = vmax.f32 %v1741, 0.0
      %v1774 = vmax.f32 %v1742, 0.0
      %v1775 = vmax.f32 %v1743, 0.0
      %v1776 = vmax.f32 %v1744, 0.0
      %v1777 = vmax.f32 %v1745, 0.0
      %v1778 = vmax.f32 %v1746, 0.0
      %v1779 = vmax.f32 %v1747, 0.0
      %v1780 = vmax.f32 %v1748, 0.0
      %v1781 = vmax.f32 %v1749, 0.0
      %v1782 = vmax.f32 %v1750, 0.0
      %v1783 = vmax.f32 %v1751, 0.0
      %v1784 = vmax.f32 %v1752, 0.0
      %v1785 = vmax.f32 %v1753, 0.0
      %v1786 = vld [vmem:[%s6] sm:$0xff]
      %v1787 = vld [vmem:[%s6 + $0x8] sm:$0xff]
      %v1789 = vsel %vm992, %v1754, 0
      %v1792 = vsel %vm992, %v1755, 0
      %v1795 = vsel %vm992, %v1756, 0
      %v1798 = vsel %vm992, %v1757, 0
      %v1801 = vsel %vm992, %v1758, 0
      %v1804 = vsel %vm992, %v1759, 0
      %v1807 = vsel %vm992, %v1760, 0
      %v1810 = vsel %vm992, %v1761, 0
      %v1813 = vsel %vm992, %v1762, 0
      %v1816 = vsel %vm992, %v1763, 0
      %v1819 = vsel %vm992, %v1764, 0
      %v1822 = vsel %vm992, %v1765, 0
      %v1825 = vsel %vm992, %v1766, 0
      %v1828 = vsel %vm992, %v1767, 0
      %v1831 = vsel %vm992, %v1768, 0
      %v1834 = vsel %vm992, %v1769, 0
      %v1837 = vsel %vm992, %v1770, 0
      %v1840 = vsel %vm992, %v1771, 0
      %v1843 = vsel %vm992, %v1772, 0
      %v1846 = vsel %vm992, %v1773, 0
      %v1849 = vsel %vm992, %v1774, 0
      %v1852 = vsel %vm992, %v1775, 0
      %v1855 = vsel %vm992, %v1776, 0
      %v1858 = vsel %vm992, %v1777, 0
      %v1861 = vsel %vm992, %v1778, 0
      %v1864 = vsel %vm992, %v1779, 0
      %v1867 = vsel %vm992, %v1780, 0
      %v1870 = vsel %vm992, %v1781, 0
      %v1873 = vsel %vm992, %v1782, 0
      %v1876 = vsel %vm992, %v1783, 0
      %v1879 = vsel %vm992, %v1784, 0
      %v1882 = vsel %vm992, %v1785, 0
      %1884 = vmatpush.msra.mxu0 0.0
      %1885 = vmatpush.msra.mxu0 0.0
      %1886 = vmatpush.msra.mxu0 0.0
      %1887 = vmatpush.msra.mxu0 0.0
      %1888 = vmatpush.msra.mxu0 0.0
      %1889 = vmatpush.msra.mxu0 0.0
      %1890 = vmatpush.msra.mxu0 0.0
      %1891 = vmatpush.msra.mxu0 0.0
      %1892 = vmatpush.msra.mxu0 0.0
      %1893 = vmatpush.msra.mxu0 0.0
      %1894 = vmatpush.msra.mxu0 0.0
      %1895 = vmatpush.msra.mxu0 0.0
      %1896 = vmatpush.msra.mxu0 0.0
      %1897 = vmatpush.msra.mxu0 0.0
      %1898 = vmatpush.msra.mxu0 %v1787
      %1899 = vmatpush.msra.mxu0 %v1786
      %1900 = vmatmul.f32.gmra.mxu0 %v1789
      %v1901 = vpop.f32.mrf.mxu0
      %v1902 = vadd.f32 0.0, %v1901
      %1903 = vmatmul.f32.gmra.mxu0 %v1792
      %v1904 = vpop.f32.mrf.mxu0
      %v1905 = vadd.f32 0.0, %v1904
      %1906 = vmatmul.f32.gmra.mxu0 %v1795
      %v1907 = vpop.f32.mrf.mxu0
      %v1908 = vadd.f32 0.0, %v1907
      %1909 = vmatmul.f32.gmra.mxu0 %v1798
      %v1910 = vpop.f32.mrf.mxu0
      %v1911 = vadd.f32 0.0, %v1910
      %1912 = vmatmul.f32.gmra.mxu0 %v1801
      %v1913 = vpop.f32.mrf.mxu0
      %v1914 = vadd.f32 0.0, %v1913
      %1915 = vmatmul.f32.gmra.mxu0 %v1804
      %v1916 = vpop.f32.mrf.mxu0
      %v1917 = vadd.f32 0.0, %v1916
      %1918 = vmatmul.f32.gmra.mxu0 %v1807
      %v1919 = vpop.f32.mrf.mxu0
      %v1920 = vadd.f32 0.0, %v1919
      %1921 = vmatmul.f32.gmra.mxu0 %v1810
      %v1922 = vpop.f32.mrf.mxu0
      %v1923 = vadd.f32 0.0, %v1922
      %1924 = vmatmul.f32.gmra.mxu0 %v1813
      %v1925 = vpop.f32.mrf.mxu0
      %v1926 = vadd.f32 0.0, %v1925
      %1927 = vmatmul.f32.gmra.mxu0 %v1816
      %v1928 = vpop.f32.mrf.mxu0
      %v1929 = vadd.f32 0.0, %v1928
      %1930 = vmatmul.f32.gmra.mxu0 %v1819
      %v1931 = vpop.f32.mrf.mxu0
      %v1932 = vadd.f32 0.0, %v1931
      %1933 = vmatmul.f32.gmra.mxu0 %v1822
      %v1934 = vpop.f32.mrf.mxu0
      %v1935 = vadd.f32 0.0, %v1934
      %1936 = vmatmul.f32.gmra.mxu0 %v1825
      %v1937 = vpop.f32.mrf.mxu0
      %v1938 = vadd.f32 0.0, %v1937
      %1939 = vmatmul.f32.gmra.mxu0 %v1828
      %v1940 = vpop.f32.mrf.mxu0
      %v1941 = vadd.f32 0.0, %v1940
      %1942 = vmatmul.f32.gmra.mxu0 %v1831
      %v1943 = vpop.f32.mrf.mxu0
      %v1944 = vadd.f32 0.0, %v1943
      %1945 = vmatmul.f32.gmra.mxu0 %v1834
      %v1946 = vpop.f32.mrf.mxu0
      %v1947 = vadd.f32 0.0, %v1946
      %1948 = vmatmul.f32.gmra.mxu0 %v1837
      %v1949 = vpop.f32.mrf.mxu0
      %v1950 = vadd.f32 0.0, %v1949
      %1951 = vmatmul.f32.gmra.mxu0 %v1840
      %v1952 = vpop.f32.mrf.mxu0
      %v1953 = vadd.f32 0.0, %v1952
      %1954 = vmatmul.f32.gmra.mxu0 %v1843
      %v1955 = vpop.f32.mrf.mxu0
      %v1956 = vadd.f32 0.0, %v1955
      %1957 = vmatmul.f32.gmra.mxu0 %v1846
      %v1958 = vpop.f32.mrf.mxu0
      %v1959 = vadd.f32 0.0, %v1958
      %1960 = vmatmul.f32.gmra.mxu0 %v1849
      %v1961 = vpop.f32.mrf.mxu0
      %v1962 = vadd.f32 0.0, %v1961
      %1963 = vmatmul.f32.gmra.mxu0 %v1852
      %v1964 = vpop.f32.mrf.mxu0
      %v1965 = vadd.f32 0.0, %v1964
      %1966 = vmatmul.f32.gmra.mxu0 %v1855
      %v1967 = vpop.f32.mrf.mxu0
      %v1968 = vadd.f32 0.0, %v1967
      %1969 = vmatmul.f32.gmra.mxu0 %v1858
      %v1970 = vpop.f32.mrf.mxu0
      %v1971 = vadd.f32 0.0, %v1970
      %1972 = vmatmul.f32.gmra.mxu0 %v1861
      %v1973 = vpop.f32.mrf.mxu0
      %v1974 = vadd.f32 0.0, %v1973
      %1975 = vmatmul.f32.gmra.mxu0 %v1864
      %v1976 = vpop.f32.mrf.mxu0
      %v1977 = vadd.f32 0.0, %v1976
      %1978 = vmatmul.f32.gmra.mxu0 %v1867
      %v1979 = vpop.f32.mrf.mxu0
      %v1980 = vadd.f32 0.0, %v1979
      %1981 = vmatmul.f32.gmra.mxu0 %v1870
      %v1982 = vpop.f32.mrf.mxu0
      %v1983 = vadd.f32 0.0, %v1982
      %1984 = vmatmul.f32.gmra.mxu0 %v1873
      %v1985 = vpop.f32.mrf.mxu0
      %v1986 = vadd.f32 0.0, %v1985
      %1987 = vmatmul.f32.gmra.mxu0 %v1876
      %v1988 = vpop.f32.mrf.mxu0
      %v1989 = vadd.f32 0.0, %v1988
      %1990 = vmatmul.f32.gmra.mxu0 %v1879
      %v1991 = vpop.f32.mrf.mxu0
      %v1992 = vadd.f32 0.0, %v1991
      %1993 = vmatmul.f32.gmra.mxu0 %v1882
      %v1994 = vpop.f32.mrf.mxu0
      %v1995 = vadd.f32 0.0, %v1994
      %1996 = vdwg.mxu0
      %vm1997 = vcmask 7168
      %1998 = vst.msk [vmem:[#allocation2] sm:$0xff] %vm1997, %v1902
      %1999 = vst.msk [vmem:[#allocation2 + $0x8] sm:$0xff] %vm1997, %v1905
      %2000 = vst.msk [vmem:[#allocation2 + $0x10] sm:$0xff] %vm1997, %v1908
      %2001 = vst.msk [vmem:[#allocation2 + $0x18] sm:$0xff] %vm1997, %v1911
      %2002 = vst.msk [vmem:[#allocation2 + $0x20] sm:$0xff] %vm1997, %v1914
      %2003 = vst.msk [vmem:[#allocation2 + $0x28] sm:$0xff] %vm1997, %v1917
      %2004 = vst.msk [vmem:[#allocation2 + $0x30] sm:$0xff] %vm1997, %v1920
      %2005 = vst.msk [vmem:[#allocation2 + $0x38] sm:$0xff] %vm1997, %v1923
      %2006 = vst.msk [vmem:[#allocation2 + $0x40] sm:$0xff] %vm1997, %v1926
      %2007 = vst.msk [vmem:[#allocation2 + $0x48] sm:$0xff] %vm1997, %v1929
      %2008 = vst.msk [vmem:[#allocation2 + $0x50] sm:$0xff] %vm1997, %v1932
      %2009 = vst.msk [vmem:[#allocation2 + $0x58] sm:$0xff] %vm1997, %v1935
      %2010 = vst.msk [vmem:[#allocation2 + $0x60] sm:$0xff] %vm1997, %v1938
      %2011 = vst.msk [vmem:[#allocation2 + $0x68] sm:$0xff] %vm1997, %v1941
      %2012 = vst.msk [vmem:[#allocation2 + $0x70] sm:$0xff] %vm1997, %v1944
      %2013 = vst.msk [vmem:[#allocation2 + $0x78] sm:$0xff] %vm1997, %v1947
      %2014 = vst.msk [vmem:[#allocation2 + $0x80] sm:$0xff] %vm1997, %v1950
      %2015 = vst.msk [vmem:[#allocation2 + $0x88] sm:$0xff] %vm1997, %v1953
      %2016 = vst.msk [vmem:[#allocation2 + $0x90] sm:$0xff] %vm1997, %v1956
      %2017 = vst.msk [vmem:[#allocation2 + $0x98] sm:$0xff] %vm1997, %v1959
      %2018 = vst.msk [vmem:[#allocation2 + $0xa0] sm:$0xff] %vm1997, %v1962
      %2019 = vst.msk [vmem:[#allocation2 + $0xa8] sm:$0xff] %vm1997, %v1965
      %2020 = vst.msk [vmem:[#allocation2 + $0xb0] sm:$0xff] %vm1997, %v1968
      %2021 = vst.msk [vmem:[#allocation2 + $0xb8] sm:$0xff] %vm1997, %v1971
      %2022 = vst.msk [vmem:[#allocation2 + $0xc0] sm:$0xff] %vm1997, %v1974
      %2023 = vst.msk [vmem:[#allocation2 + $0xc8] sm:$0xff] %vm1997, %v1977
      %2024 = vst.msk [vmem:[#allocation2 + $0xd0] sm:$0xff] %vm1997, %v1980
      %2025 = vst.msk [vmem:[#allocation2 + $0xd8] sm:$0xff] %vm1997, %v1983
      %2026 = vst.msk [vmem:[#allocation2 + $0xe0] sm:$0xff] %vm1997, %v1986
      %2027 = vst.msk [vmem:[#allocation2 + $0xe8] sm:$0xff] %vm1997, %v1989
      %2028 = vst.msk [vmem:[#allocation2 + $0xf0] sm:$0xff] %vm1997, %v1992
      %2029 = vst.msk [vmem:[#allocation2 + $0xf8] sm:$0xff] %vm1997, %v1995
      %v2030 = vld [vmem:[%s7] sm:$0x1]
      %v2032 = vsel %vm992, %v2030, 0
      %2034 = vmatpush.xpose.msra.mxu0 %v1834
      %2035 = vmatpush.xpose.msra.mxu0 %v1831
      %2036 = vmatpush.xpose.msra.mxu0 %v1828
      %2037 = vmatpush.xpose.msra.mxu0 %v1825
      %2038 = vmatpush.xpose.msra.mxu0 %v1822
      %2039 = vmatpush.xpose.msra.mxu0 %v1819
      %2040 = vmatpush.xpose.msra.mxu0 %v1816
      %2041 = vmatpush.xpose.msra.mxu0 %v1813
      %2042 = vmatpush.xpose.msra.mxu0 %v1810
      %2043 = vmatpush.xpose.msra.mxu0 %v1807
      %2044 = vmatpush.xpose.msra.mxu0 %v1804
      %2045 = vmatpush.xpose.msra.mxu0 %v1801
      %2046 = vmatpush.xpose.msra.mxu0 %v1798
      %2047 = vmatpush.xpose.msra.mxu0 %v1795
      %2048 = vmatpush.xpose.msra.mxu0 %v1792
      %2049 = vmatpush.xpose.msra.mxu0 %v1789
      %2050 = vmatmul.f32.gmra.mxu0 %v2032
      %v2051 = vpop.f32.mrf.mxu0
      %v2052 = vadd.f32 0.0, %v2051
      %2053 = vdwg.mxu0
      %2054 = vmatpush.xpose.msra.mxu0 %v1882
      %2055 = vmatpush.xpose.msra.mxu0 %v1879
      %2056 = vmatpush.xpose.msra.mxu0 %v1876
      %2057 = vmatpush.xpose.msra.mxu0 %v1873
      %2058 = vmatpush.xpose.msra.mxu0 %v1870
      %2059 = vmatpush.xpose.msra.mxu0 %v1867
      %2060 = vmatpush.xpose.msra.mxu0 %v1864
      %2061 = vmatpush.xpose.msra.mxu0 %v1861
      %2062 = vmatpush.xpose.msra.mxu0 %v1858
      %2063 = vmatpush.xpose.msra.mxu0 %v1855
      %2064 = vmatpush.xpose.msra.mxu0 %v1852
      %2065 = vmatpush.xpose.msra.mxu0 %v1849
      %2066 = vmatpush.xpose.msra.mxu0 %v1846
      %2067 = vmatpush.xpose.msra.mxu0 %v1843
      %2068 = vmatpush.xpose.msra.mxu0 %v1840
      %2069 = vmatpush.xpose.msra.mxu0 %v1837
      %2070 = vmatmul.f32.gmra.mxu0 %v2032
      %v2071 = vpop.f32.mrf.mxu0
      %v2072 = vadd.f32 0.0, %v2071
      %2073 = vdwg.mxu0
      %2074 = vst [vmem:[#allocation3] sm:$0x1] %v2052
      %2075 = vst [vmem:[#allocation3 + $0x1] sm:$0x1] %v2072
    $region41: #{tpu_custom_call.1} parent=1 // pred_fallthru
      _
    %s2076 = smul.u32 0, 128
    %v2077 = vld [vmem:[#allocation2] sm:$0xff]
    %v2078 = vld [vmem:[#allocation2 + $0x8] sm:$0xff]
    %v2079 = vld [vmem:[#allocation2 + $0x10] sm:$0xff]
    %v2080 = vld [vmem:[#allocation2 + $0x18] sm:$0xff]
    %v2081 = vld [vmem:[#allocation2 + $0x20] sm:$0xff]
    %v2082 = vld [vmem:[#allocation2 + $0x28] sm:$0xff]
    %v2083 = vld [vmem:[#allocation2 + $0x30] sm:$0xff]
    %v2084 = vld [vmem:[#allocation2 + $0x38] sm:$0xff]
    %v2085 = vld [vmem:[#allocation2 + $0x40] sm:$0xff]
    %v2086 = vld [vmem:[#allocation2 + $0x48] sm:$0xff]
    %v2087 = vld [vmem:[#allocation2 + $0x50] sm:$0xff]
    %v2088 = vld [vmem:[#allocation2 + $0x58] sm:$0xff]
    %v2089 = vld [vmem:[#allocation2 + $0x60] sm:$0xff]
    %v2090 = vld [vmem:[#allocation2 + $0x68] sm:$0xff]
    %v2091 = vld [vmem:[#allocation2 + $0x70] sm:$0xff]
    %v2092 = vld [vmem:[#allocation2 + $0x78] sm:$0xff]
    %v2093 = vld [vmem:[#allocation2 + $0x80] sm:$0xff]
    %v2094 = vld [vmem:[#allocation2 + $0x88] sm:$0xff]
    %v2095 = vld [vmem:[#allocation2 + $0x90] sm:$0xff]
    %v2096 = vld [vmem:[#allocation2 + $0x98] sm:$0xff]
    %v2097 = vld [vmem:[#allocation2 + $0xa0] sm:$0xff]
    %v2098 = vld [vmem:[#allocation2 + $0xa8] sm:$0xff]
    %v2099 = vld [vmem:[#allocation2 + $0xb0] sm:$0xff]
    %v2100 = vld [vmem:[#allocation2 + $0xb8] sm:$0xff]
    %v2101 = vld [vmem:[#allocation2 + $0xc0] sm:$0xff]
    %v2102 = vld [vmem:[#allocation2 + $0xc8] sm:$0xff]
    %v2103 = vld [vmem:[#allocation2 + $0xd0] sm:$0xff]
    %v2104 = vld [vmem:[#allocation2 + $0xd8] sm:$0xff]
    %v2105 = vld [vmem:[#allocation2 + $0xe0] sm:$0xff]
    %v2106 = vld [vmem:[#allocation2 + $0xe8] sm:$0xff]
    %v2107 = vld [vmem:[#allocation2 + $0xf0] sm:$0xff]
    %v2108 = vld [vmem:[#allocation2 + $0xf8] sm:$0xff]
    %s2109 = sshra.s32 %s2076, 7
    %s2110 = sand.u32 %s2076, 127
    %s2111 = scalar_lea.vmem [#allocation3], %s2109
    %v2112 = vld [vmem:[%s2111] sm:$0x1]
    %v2113 = vld [vmem:[%s2111 + $0x1] sm:$0x1]
    %2115 = vset.pattern.permute.xlu0 0
    %2116 = vperm.xlu0 %2115, %v2077
    %v2117 = vpop.permute.xlu0 %2116
    %2120 = vset.pattern.permute.xlu0 0
    %2121 = vperm.xlu0 %2120, %v2078
    %v2122 = vpop.permute.xlu0 %2121
    %2125 = vset.pattern.permute.xlu0 0
    %2126 = vperm.xlu0 %2125, %v2079
    %v2127 = vpop.permute.xlu0 %2126
    %2130 = vset.pattern.permute.xlu0 0
    %2131 = vperm.xlu0 %2130, %v2080
    %v2132 = vpop.permute.xlu0 %2131
    %2135 = vset.pattern.permute.xlu0 0
    %2136 = vperm.xlu0 %2135, %v2081
    %v2137 = vpop.permute.xlu0 %2136
    %2140 = vset.pattern.permute.xlu0 0
    %2141 = vperm.xlu0 %2140, %v2082
    %v2142 = vpop.permute.xlu0 %2141
    %2145 = vset.pattern.permute.xlu0 0
    %2146 = vperm.xlu0 %2145, %v2083
    %v2147 = vpop.permute.xlu0 %2146
    %2150 = vset.pattern.permute.xlu0 0
    %2151 = vperm.xlu0 %2150, %v2084
    %v2152 = vpop.permute.xlu0 %2151
    %2155 = vset.pattern.permute.xlu0 0
    %2156 = vperm.xlu0 %2155, %v2085
    %v2157 = vpop.permute.xlu0 %2156
    %2160 = vset.pattern.permute.xlu0 0
    %2161 = vperm.xlu0 %2160, %v2086
    %v2162 = vpop.permute.xlu0 %2161
    %2165 = vset.pattern.permute.xlu0 0
    %2166 = vperm.xlu0 %2165, %v2087
    %v2167 = vpop.permute.xlu0 %2166
    %2170 = vset.pattern.permute.xlu0 0
    %2171 = vperm.xlu0 %2170, %v2088
    %v2172 = vpop.permute.xlu0 %2171
    %2175 = vset.pattern.permute.xlu0 0
    %2176 = vperm.xlu0 %2175, %v2089
    %v2177 = vpop.permute.xlu0 %2176
    %2180 = vset.pattern.permute.xlu0 0
    %2181 = vperm.xlu0 %2180, %v2090
    %v2182 = vpop.permute.xlu0 %2181
    %2185 = vset.pattern.permute.xlu0 0
    %2186 = vperm.xlu0 %2185, %v2091
    %v2187 = vpop.permute.xlu0 %2186
    %2190 = vset.pattern.permute.xlu0 0
    %2191 = vperm.xlu0 %2190, %v2092
    %v2192 = vpop.permute.xlu0 %2191
    %2195 = vset.pattern.permute.xlu0 0
    %2196 = vperm.xlu0 %2195, %v2093
    %v2197 = vpop.permute.xlu0 %2196
    %2200 = vset.pattern.permute.xlu0 0
    %2201 = vperm.xlu0 %2200, %v2094
    %v2202 = vpop.permute.xlu0 %2201
    %2205 = vset.pattern.permute.xlu0 0
    %2206 = vperm.xlu0 %2205, %v2095
    %v2207 = vpop.permute.xlu0 %2206
    %2210 = vset.pattern.permute.xlu0 0
    %2211 = vperm.xlu0 %2210, %v2096
    %v2212 = vpop.permute.xlu0 %2211
    %2215 = vset.pattern.permute.xlu0 0
    %2216 = vperm.xlu0 %2215, %v2097
    %v2217 = vpop.permute.xlu0 %2216
    %2220 = vset.pattern.permute.xlu0 0
    %2221 = vperm.xlu0 %2220, %v2098
    %v2222 = vpop.permute.xlu0 %2221
    %2225 = vset.pattern.permute.xlu0 0
    %2226 = vperm.xlu0 %2225, %v2099
    %v2227 = vpop.permute.xlu0 %2226
    %2230 = vset.pattern.permute.xlu0 0
    %2231 = vperm.xlu0 %2230, %v2100
    %v2232 = vpop.permute.xlu0 %2231
    %2235 = vset.pattern.permute.xlu0 0
    %2236 = vperm.xlu0 %2235, %v2101
    %v2237 = vpop.permute.xlu0 %2236
    %2240 = vset.pattern.permute.xlu0 0
    %2241 = vperm.xlu0 %2240, %v2102
    %v2242 = vpop.permute.xlu0 %2241
    %2245 = vset.pattern.permute.xlu0 0
    %2246 = vperm.xlu0 %2245, %v2103
    %v2247 = vpop.permute.xlu0 %2246
    %2250 = vset.pattern.permute.xlu0 0
    %2251 = vperm.xlu0 %2250, %v2104
    %v2252 = vpop.permute.xlu0 %2251
    %2255 = vset.pattern.permute.xlu0 0
    %2256 = vperm.xlu0 %2255, %v2105
    %v2257 = vpop.permute.xlu0 %2256
    %2260 = vset.pattern.permute.xlu0 0
    %2261 = vperm.xlu0 %2260, %v2106
    %v2262 = vpop.permute.xlu0 %2261
    %2265 = vset.pattern.permute.xlu0 0
    %2266 = vperm.xlu0 %2265, %v2107
    %v2267 = vpop.permute.xlu0 %2266
    %2270 = vset.pattern.permute.xlu0 0
    %2271 = vperm.xlu0 %2270, %v2108
    %v2272 = vpop.permute.xlu0 %2271
    %v2276 = vperm.slane %v2112, 0
    %v2277 = vperm.slane %v2113, 0
    %v2280 = vadd.f32 %v2117, %v2276
    %v2281 = vadd.f32 %v2122, %v2276
    %v2282 = vadd.f32 %v2127, %v2276
    %v2283 = vadd.f32 %v2132, %v2276
    %v2284 = vadd.f32 %v2137, %v2276
    %v2285 = vadd.f32 %v2142, %v2276
    %v2286 = vadd.f32 %v2147, %v2276
    %v2287 = vadd.f32 %v2152, %v2276
    %v2288 = vadd.f32 %v2157, %v2276
    %v2289 = vadd.f32 %v2162, %v2276
    %v2290 = vadd.f32 %v2167, %v2276
    %v2291 = vadd.f32 %v2172, %v2276
    %v2292 = vadd.f32 %v2177, %v2276
    %v2293 = vadd.f32 %v2182, %v2276
    %v2294 = vadd.f32 %v2187, %v2276
    %v2295 = vadd.f32 %v2192, %v2276
    %v2296 = vadd.f32 %v2197, %v2277
    %v2297 = vadd.f32 %v2202, %v2277
    %v2298 = vadd.f32 %v2207, %v2277
    %v2299 = vadd.f32 %v2212, %v2277
    %v2300 = vadd.f32 %v2217, %v2277
    %v2301 = vadd.f32 %v2222, %v2277
    %v2302 = vadd.f32 %v2227, %v2277
    %v2303 = vadd.f32 %v2232, %v2277
    %v2304 = vadd.f32 %v2237, %v2277
    %v2305 = vadd.f32 %v2242, %v2277
    %v2306 = vadd.f32 %v2247, %v2277
    %v2307 = vadd.f32 %v2252, %v2277
    %v2308 = vadd.f32 %v2257, %v2277
    %v2309 = vadd.f32 %v2262, %v2277
    %v2310 = vadd.f32 %v2267, %v2277
    %v2311 = vadd.f32 %v2272, %v2277
    %v2312 = vld [vmem:[#allocation4] sm:$0x1]
    %v2314 = vperm.slane %v2312, 0
    %2315 = vset.pattern.permute.xlu0 0
    %2316 = vperm.xlu0 %2315, %v2314
    %v2317 = vpop.permute.xlu0 %2316
    %v2319 = vadd.f32 %v2280, %v2317
    %v2320 = vadd.f32 %v2281, %v2317
    %v2321 = vadd.f32 %v2282, %v2317
    %v2322 = vadd.f32 %v2283, %v2317
    %v2323 = vadd.f32 %v2284, %v2317
    %v2324 = vadd.f32 %v2285, %v2317
    %v2325 = vadd.f32 %v2286, %v2317
    %v2326 = vadd.f32 %v2287, %v2317
    %v2327 = vadd.f32 %v2288, %v2317
    %v2328 = vadd.f32 %v2289, %v2317
    %v2329 = vadd.f32 %v2290, %v2317
    %v2330 = vadd.f32 %v2291, %v2317
    %v2331 = vadd.f32 %v2292, %v2317
    %v2332 = vadd.f32 %v2293, %v2317
    %v2333 = vadd.f32 %v2294, %v2317
    %v2334 = vadd.f32 %v2295, %v2317
    %v2335 = vadd.f32 %v2296, %v2317
    %v2336 = vadd.f32 %v2297, %v2317
    %v2337 = vadd.f32 %v2298, %v2317
    %v2338 = vadd.f32 %v2299, %v2317
    %v2339 = vadd.f32 %v2300, %v2317
    %v2340 = vadd.f32 %v2301, %v2317
    %v2341 = vadd.f32 %v2302, %v2317
    %v2342 = vadd.f32 %v2303, %v2317
    %v2343 = vadd.f32 %v2304, %v2317
    %v2344 = vadd.f32 %v2305, %v2317
    %v2345 = vadd.f32 %v2306, %v2317
    %v2346 = vadd.f32 %v2307, %v2317
    %v2347 = vadd.f32 %v2308, %v2317
    %v2348 = vadd.f32 %v2309, %v2317
    %v2349 = vadd.f32 %v2310, %v2317
    %v2350 = vadd.f32 %v2311, %v2317
    %v2351 = vmul.f32 %v2319, 0.5
    %v2352 = vmul.f32 %v2320, 0.5
    %v2353 = vmul.f32 %v2321, 0.5
    %v2354 = vmul.f32 %v2322, 0.5
    %v2355 = vmul.f32 %v2323, 0.5
    %v2356 = vmul.f32 %v2324, 0.5
    %v2357 = vmul.f32 %v2325, 0.5
    %v2358 = vmul.f32 %v2326, 0.5
    %v2359 = vmul.f32 %v2327, 0.5
    %v2360 = vmul.f32 %v2328, 0.5
    %v2361 = vmul.f32 %v2329, 0.5
    %v2362 = vmul.f32 %v2330, 0.5
    %v2363 = vmul.f32 %v2331, 0.5
    %v2364 = vmul.f32 %v2332, 0.5
    %v2365 = vmul.f32 %v2333, 0.5
    %v2366 = vmul.f32 %v2334, 0.5
    %v2367 = vmul.f32 %v2335, 0.5
    %v2368 = vmul.f32 %v2336, 0.5
    %v2369 = vmul.f32 %v2337, 0.5
    %v2370 = vmul.f32 %v2338, 0.5
    %v2371 = vmul.f32 %v2339, 0.5
    %v2372 = vmul.f32 %v2340, 0.5
    %v2373 = vmul.f32 %v2341, 0.5
    %v2374 = vmul.f32 %v2342, 0.5
    %v2375 = vmul.f32 %v2343, 0.5
    %v2376 = vmul.f32 %v2344, 0.5
    %v2377 = vmul.f32 %v2345, 0.5
    %v2378 = vmul.f32 %v2346, 0.5
    %v2379 = vmul.f32 %v2347, 0.5
    %v2380 = vmul.f32 %v2348, 0.5
    %v2381 = vmul.f32 %v2349, 0.5
    %v2382 = vmul.f32 %v2350, 0.5
    %v2383 = vtanh.pop %v2351
    %v2384 = vtanh.pop %v2352
    %v2385 = vtanh.pop %v2353
    %v2386 = vtanh.pop %v2354
    %v2387 = vtanh.pop %v2355
    %v2388 = vtanh.pop %v2356
    %v2389 = vtanh.pop %v2357
    %v2390 = vtanh.pop %v2358
    %v2391 = vtanh.pop %v2359
    %v2392 = vtanh.pop %v2360
    %v2393 = vtanh.pop %v2361
    %v2394 = vtanh.pop %v2362
    %v2395 = vtanh.pop %v2363
    %v2396 = vtanh.pop %v2364
    %v2397 = vtanh.pop %v2365
    %v2398 = vtanh.pop %v2366
    %v2399 = vtanh.pop %v2367
    %v2400 = vtanh.pop %v2368
    %v2401 = vtanh.pop %v2369
    %v2402 = vtanh.pop %v2370
    %v2403 = vtanh.pop %v2371
    %v2404 = vtanh.pop %v2372
    %v2405 = vtanh.pop %v2373
    %v2406 = vtanh.pop %v2374
    %v2407 = vtanh.pop %v2375
    %v2408 = vtanh.pop %v2376
    %v2409 = vtanh.pop %v2377
    %v2410 = vtanh.pop %v2378
    %v2411 = vtanh.pop %v2379
    %v2412 = vtanh.pop %v2380
    %v2413 = vtanh.pop %v2381
    %v2414 = vtanh.pop %v2382
    %v2415 = vmul.f32 %v2383, 0.5
    %v2416 = vmul.f32 %v2384, 0.5
    %v2417 = vmul.f32 %v2385, 0.5
    %v2418 = vmul.f32 %v2386, 0.5
    %v2419 = vmul.f32 %v2387, 0.5
    %v2420 = vmul.f32 %v2388, 0.5
    %v2421 = vmul.f32 %v2389, 0.5
    %v2422 = vmul.f32 %v2390, 0.5
    %v2423 = vmul.f32 %v2391, 0.5
    %v2424 = vmul.f32 %v2392, 0.5
    %v2425 = vmul.f32 %v2393, 0.5
    %v2426 = vmul.f32 %v2394, 0.5
    %v2427 = vmul.f32 %v2395, 0.5
    %v2428 = vmul.f32 %v2396, 0.5
    %v2429 = vmul.f32 %v2397, 0.5
    %v2430 = vmul.f32 %v2398, 0.5
    %v2431 = vmul.f32 %v2399, 0.5
    %v2432 = vmul.f32 %v2400, 0.5
    %v2433 = vmul.f32 %v2401, 0.5
    %v2434 = vmul.f32 %v2402, 0.5
    %v2435 = vmul.f32 %v2403, 0.5
    %v2436 = vmul.f32 %v2404, 0.5
    %v2437 = vmul.f32 %v2405, 0.5
    %v2438 = vmul.f32 %v2406, 0.5
    %v2439 = vmul.f32 %v2407, 0.5
    %v2440 = vmul.f32 %v2408, 0.5
    %v2441 = vmul.f32 %v2409, 0.5
    %v2442 = vmul.f32 %v2410, 0.5
    %v2443 = vmul.f32 %v2411, 0.5
    %v2444 = vmul.f32 %v2412, 0.5
    %v2445 = vmul.f32 %v2413, 0.5
    %v2446 = vmul.f32 %v2414, 0.5
    %v2447 = vadd.f32 %v2415, 0.5
    %v2448 = vadd.f32 %v2416, 0.5
    %v2449 = vadd.f32 %v2417, 0.5
    %v2450 = vadd.f32 %v2418, 0.5
    %v2451 = vadd.f32 %v2419, 0.5
    %v2452 = vadd.f32 %v2420, 0.5
    %v2453 = vadd.f32 %v2421, 0.5
    %v2454 = vadd.f32 %v2422, 0.5
    %v2455 = vadd.f32 %v2423, 0.5
    %v2456 = vadd.f32 %v2424, 0.5
    %v2457 = vadd.f32 %v2425, 0.5
    %v2458 = vadd.f32 %v2426, 0.5
    %v2459 = vadd.f32 %v2427, 0.5
    %v2460 = vadd.f32 %v2428, 0.5
    %v2461 = vadd.f32 %v2429, 0.5
    %v2462 = vadd.f32 %v2430, 0.5
    %v2463 = vadd.f32 %v2431, 0.5
    %v2464 = vadd.f32 %v2432, 0.5
    %v2465 = vadd.f32 %v2433, 0.5
    %v2466 = vadd.f32 %v2434, 0.5
    %v2467 = vadd.f32 %v2435, 0.5
    %v2468 = vadd.f32 %v2436, 0.5
    %v2469 = vadd.f32 %v2437, 0.5
    %v2470 = vadd.f32 %v2438, 0.5
    %v2471 = vadd.f32 %v2439, 0.5
    %v2472 = vadd.f32 %v2440, 0.5
    %v2473 = vadd.f32 %v2441, 0.5
    %v2474 = vadd.f32 %v2442, 0.5
    %v2475 = vadd.f32 %v2443, 0.5
    %v2476 = vadd.f32 %v2444, 0.5
    %v2477 = vadd.f32 %v2445, 0.5
    %v2478 = vadd.f32 %v2446, 0.5
    %v2479 = vpack.c.bf16 %v2447, %v2447
    %v2480 = vpack.c.bf16 %v2448, %v2448
    %v2481 = vpack.c.bf16 %v2449, %v2449
    %v2482 = vpack.c.bf16 %v2450, %v2450
    %v2483 = vpack.c.bf16 %v2451, %v2451
    %v2484 = vpack.c.bf16 %v2452, %v2452
    %v2485 = vpack.c.bf16 %v2453, %v2453
    %v2486 = vpack.c.bf16 %v2454, %v2454
    %v2487 = vpack.c.bf16 %v2455, %v2455
    %v2488 = vpack.c.bf16 %v2456, %v2456
    %v2489 = vpack.c.bf16 %v2457, %v2457
    %v2490 = vpack.c.bf16 %v2458, %v2458
    %v2491 = vpack.c.bf16 %v2459, %v2459
    %v2492 = vpack.c.bf16 %v2460, %v2460
    %v2493 = vpack.c.bf16 %v2461, %v2461
    %v2494 = vpack.c.bf16 %v2462, %v2462
    %v2495 = vpack.c.bf16 %v2463, %v2463
    %v2496 = vpack.c.bf16 %v2464, %v2464
    %v2497 = vpack.c.bf16 %v2465, %v2465
    %v2498 = vpack.c.bf16 %v2466, %v2466
    %v2499 = vpack.c.bf16 %v2467, %v2467
    %v2500 = vpack.c.bf16 %v2468, %v2468
    %v2501 = vpack.c.bf16 %v2469, %v2469
    %v2502 = vpack.c.bf16 %v2470, %v2470
    %v2503 = vpack.c.bf16 %v2471, %v2471
    %v2504 = vpack.c.bf16 %v2472, %v2472
    %v2505 = vpack.c.bf16 %v2473, %v2473
    %v2506 = vpack.c.bf16 %v2474, %v2474
    %v2507 = vpack.c.bf16 %v2475, %v2475
    %v2508 = vpack.c.bf16 %v2476, %v2476
    %v2509 = vpack.c.bf16 %v2477, %v2477
    %v2510 = vpack.c.bf16 %v2478, %v2478
    %2511 = vst [vmem:[#allocation5] sm:$0xf] %v2479
    %2512 = vst [vmem:[#allocation5 + $0x4] sm:$0xf] %v2480
    %2513 = vst [vmem:[#allocation5 + $0x8] sm:$0xf] %v2481
    %2514 = vst [vmem:[#allocation5 + $0xc] sm:$0xf] %v2482
    %2515 = vst [vmem:[#allocation5 + $0x10] sm:$0xf] %v2483
    %2516 = vst [vmem:[#allocation5 + $0x14] sm:$0xf] %v2484
    %2517 = vst [vmem:[#allocation5 + $0x18] sm:$0xf] %v2485
    %2518 = vst [vmem:[#allocation5 + $0x1c] sm:$0xf] %v2486
    %2519 = vst [vmem:[#allocation5 + $0x20] sm:$0xf] %v2487
    %2520 = vst [vmem:[#allocation5 + $0x24] sm:$0xf] %v2488
    %2521 = vst [vmem:[#allocation5 + $0x28] sm:$0xf] %v2489
    %2522 = vst [vmem:[#allocation5 + $0x2c] sm:$0xf] %v2490
    %2523 = vst [vmem:[#allocation5 + $0x30] sm:$0xf] %v2491
    %2524 = vst [vmem:[#allocation5 + $0x34] sm:$0xf] %v2492
    %2525 = vst [vmem:[#allocation5 + $0x38] sm:$0xf] %v2493
    %2526 = vst [vmem:[#allocation5 + $0x3c] sm:$0xf] %v2494
    %2527 = vst [vmem:[#allocation5 + $0x40] sm:$0xf] %v2495
    %2528 = vst [vmem:[#allocation5 + $0x44] sm:$0xf] %v2496
    %2529 = vst [vmem:[#allocation5 + $0x48] sm:$0xf] %v2497
    %2530 = vst [vmem:[#allocation5 + $0x4c] sm:$0xf] %v2498
    %2531 = vst [vmem:[#allocation5 + $0x50] sm:$0xf] %v2499
    %2532 = vst [vmem:[#allocation5 + $0x54] sm:$0xf] %v2500
    %2533 = vst [vmem:[#allocation5 + $0x58] sm:$0xf] %v2501
    %2534 = vst [vmem:[#allocation5 + $0x5c] sm:$0xf] %v2502
    %2535 = vst [vmem:[#allocation5 + $0x60] sm:$0xf] %v2503
    %2536 = vst [vmem:[#allocation5 + $0x64] sm:$0xf] %v2504
    %2537 = vst [vmem:[#allocation5 + $0x68] sm:$0xf] %v2505
    %2538 = vst [vmem:[#allocation5 + $0x6c] sm:$0xf] %v2506
    %2539 = vst [vmem:[#allocation5 + $0x70] sm:$0xf] %v2507
    %2540 = vst [vmem:[#allocation5 + $0x74] sm:$0xf] %v2508
    %2541 = vst [vmem:[#allocation5 + $0x78] sm:$0xf] %v2509
    %2542 = vst [vmem:[#allocation5 + $0x7c] sm:$0xf] %v2510
    // Predicated region
    $region42: #{tpu_custom_call.1} parent=1 // pred_check
      _
    $region43: #{tpu_custom_call.1} parent=1 // pred_check_branch
      %2544 = sbr.rel (0) target = $region45
    $region44: #{tpu_custom_call.1} parent=1 // pred_region
      %2546 = vsyncadd [#allocation6], 0
      %s2547 = sshll.u32 [#allocation5], 4
      %s2548 = int_to_ptr.vmem [resolvable:$true] %s2547
      %s2549 = sshll.u32 %s9, 4
      %s2550 = int_to_ptr.hbm [resolvable:$true] %s2549
      %2555 = dma.vmem_to_hbm [thread:$0]  %s2548, 2048, %s2550, [#allocation6], 64, 64, 4
    $region45: #{tpu_custom_call.1} parent=1 // pred_fallthru
      _
    // Predicated region
    $region46: #{tpu_custom_call.1} parent=1 // pred_check
      _
    $region47: #{tpu_custom_call.1} parent=1 // pred_check_branch
      %2557 = sbr.rel (0) target = $region49
    $region48: #{tpu_custom_call.1} parent=1 // pred_region
      %2559 = dma.done [#allocation6], 2048
    $region49: #{tpu_custom_call.1} parent=1 // pred_fallthru
      _
    %2560 = vsyncpa [#allocation6], 1

</llo_original>
